<compile_context>
chip_gen: v7x
topology: tpu7x:2x2x1
jax: 0.10.0
libtpu: 0.0.40
codegen_flags: <defaults>
</compile_context>

<pallas_src>
import jax
import jax.numpy as jnp
from jax.experimental import pallas as pl
from jax.experimental.pallas import tpu as pltpu

# ---- model dimensions (small demo shapes, consistent with per-object clouds) ----
B = 4              # objects (proposals) per batch -- batched so both v7x TCs get work
N = 1024           # points per object
C_IN = 4           # (x, y, z, intensity)  ~ QUERY_POINT_DIMS
H1, H2, H3 = 32, 64, 128      # shared-MLP widths
LANES = 128        # lane width of the lane-dense output rows
DEFAULT_TN = 512   # point-tile size streamed per grid step (lane axis)


def _confidence_pointnet_kernel(pts_ref, w1_ref, b1_ref, w2_ref, b2_ref,
                                w3_ref, b3_ref, w4_ref, b4_ref,
                                out_ref, acc_ref):
    """One (object b, point-tile t) grid step.

    pts_ref : [C_IN, TN]  bf16 point tile, points on the lane axis (NCL layout)
    wK_ref  : transposed Conv1d weights, bf16; bK_ref: [C_out, 1] f32 biases
    w4_ref  : [H3, 1]     f32 head weight column
    b4_ref  : [1, 1]      f32 head bias (SMEM scalar)
    acc_ref : [H3, TN]    f32 running max over this object's point tiles
    out_ref : [2, LANES]  row 0 = logit (replicated), row 1 = sigmoid score
    """
    t = pl.program_id(1)

    # Shared per-point MLP: bf16 operands into the MXU, f32 accumulate,
    # f32 bias-add / ReLU on the VPU.
    x = pts_ref[...]                                                    # bf16 [C_IN, TN]
    h = jnp.dot(w1_ref[...], x, preferred_element_type=jnp.float32)
    h = jnp.maximum(h + b1_ref[...], 0.0)
    h = jnp.dot(w2_ref[...], h.astype(jnp.bfloat16),
                preferred_element_type=jnp.float32)
    h = jnp.maximum(h + b2_ref[...], 0.0)
    h = jnp.dot(w3_ref[...], h.astype(jnp.bfloat16),
                preferred_element_type=jnp.float32)
    h = jnp.maximum(h + b3_ref[...], 0.0)                               # f32 [H3, TN]

    # Streaming symmetric max-pool over points.  No -inf init: the first tile
    # writes the accumulator directly (saves one [H3,TN] f32 store per object).
    @pl.when(t == 0)
    def _first():
        acc_ref[...] = h

    @pl.when(t > 0)
    def _rest():
        acc_ref[...] = jnp.maximum(acc_ref[...], h)

    @pl.when(t == pl.num_programs(1) - 1)
    def _finalize():
        feat = jnp.max(acc_ref[...], axis=1, keepdims=True)             # [H3, 1]
        logit = jnp.sum(feat * w4_ref[...], axis=0, keepdims=True)      # [1, 1]
        logit = logit + b4_ref[0, 0]
        score = jax.nn.sigmoid(logit)                                   # fused (EUP)
        row = jnp.concatenate([logit, score], axis=0)                   # [2, 1]
        out_ref[...] = jnp.broadcast_to(row, (2, LANES))                # one block store


def confidence_pointnet_pallas(pts_t, params, *, tn=None):
    """pts_t: [B, C_IN, N] bf16 (Conv1d NCL layout). Returns (logits, scores), each [B, 1] f32."""
    bsz, c_in, n = pts_t.shape
    if tn is None:
        tn = n if n <= DEFAULT_TN else DEFAULT_TN   # collapse tile axis when N fits
    assert n % tn == 0, "point count must be a multiple of the point tile"
    n_tiles = n // tn
    w1, b1, w2, b2, w3, b3, w4, b4 = params

    def const(b, t):            # weights/biases stay VMEM-resident across the grid
        return (0, 0)

    flops = 2 * bsz * n * (C_IN * H1 + H1 * H2 + H2 * H3) + 2 * bsz * H3
    bytes_accessed = (pts_t.size * pts_t.dtype.itemsize
                      + sum(int(p.size) * p.dtype.itemsize for p in params)
                      + bsz * 2 * LANES * 4)

    out_slab = pl.pallas_call(
        _confidence_pointnet_kernel,
        out_shape=jax.ShapeDtypeStruct((bsz, 2, LANES), jnp.float32),
        grid_spec=pltpu.PrefetchScalarGridSpec(
            num_scalar_prefetch=0,
            grid=(bsz, n_tiles),
            in_specs=[
                pl.BlockSpec((None, c_in, tn), lambda b, t: (b, 0, t)),
                pl.BlockSpec(w1.shape, const), pl.BlockSpec(b1.shape, const),
                pl.BlockSpec(w2.shape, const), pl.BlockSpec(b2.shape, const),
                pl.BlockSpec(w3.shape, const), pl.BlockSpec(b3.shape, const),
                pl.BlockSpec(w4.shape, const),
                pl.BlockSpec(memory_space=pltpu.MemorySpace.SMEM),      # b4 scalar
            ],
            out_specs=pl.BlockSpec((None, 2, LANES), lambda b, t: (b, 0, 0)),
            scratch_shapes=[pltpu.VMEM((H3, tn), jnp.float32)],
        ),
        compiler_params=pltpu.CompilerParams(
            dimension_semantics=("parallel", "arbitrary")),
        cost_estimate=pl.CostEstimate(flops=flops,
                                      transcendentals=bsz,
                                      bytes_accessed=bytes_accessed),
    )(pts_t, w1, b1, w2, b2, w3, b3, w4, b4)

    logits = out_slab[:, 0, :1]
    scores = out_slab[:, 1, :1]
    return logits, scores


def confidence_pointnet_ref(pts, params):
    """Pure-JAX reference (same bf16-in / f32-accumulate math)."""
    w1, b1, w2, b2, w3, b3, w4, b4 = params
    xT = jnp.transpose(pts, (0, 2, 1)).astype(jnp.bfloat16)            # [B, C, N]
    h = jnp.einsum('hc,bcn->bhn', w1, xT, preferred_element_type=jnp.float32)
    h = jnp.maximum(h + b1[None], 0.0)
    h = jnp.einsum('hc,bcn->bhn', w2, h.astype(jnp.bfloat16),
                   preferred_element_type=jnp.float32)
    h = jnp.maximum(h + b2[None], 0.0)
    h = jnp.einsum('hc,bcn->bhn', w3, h.astype(jnp.bfloat16),
                   preferred_element_type=jnp.float32)
    h = jnp.maximum(h + b3[None], 0.0)
    feat = jnp.max(h, axis=2)                                           # [B, H3]
    logits = feat @ w4 + b4                                             # [B, 1]
    return logits, jax.nn.sigmoid(logits)


class RefineTemplateJax:
    """Mirror of RefineTemplate holding a ConfidencePointnet `reg` head."""

    def __init__(self, key):
        ks = jax.random.split(key, 8)

        def init_w(k, fan_out, fan_in):     # stored transposed: [C_out, C_in], bf16 for the MXU
            w = jax.random.normal(k, (fan_out, fan_in), jnp.float32) / jnp.sqrt(fan_in)
            return w.astype(jnp.bfloat16)

        def init_b(k, fan_out):             # biases stay f32 (VPU epilogue)
            return 0.01 * jax.random.normal(k, (fan_out, 1), jnp.float32)

        self.params = (
            init_w(ks[0], H1, C_IN), init_b(ks[1], H1),
            init_w(ks[2], H2, H1),   init_b(ks[3], H2),
            init_w(ks[4], H3, H2),   init_b(ks[5], H3),
            (jax.random.normal(ks[6], (H3, 1), jnp.float32) / jnp.sqrt(H3)),  # head weight
            0.01 * jax.random.normal(ks[7], (1, 1), jnp.float32),             # head bias
        )
        self.global_step = 0     # register_buffer('global_step', ...) equivalent

    def update_global_step(self):
        self.global_step += 1

    def forward(self, data_dict):
        pts = data_dict['points']                                   # [B, N, C_IN] f32
        # Conv1d-native NCL layout + bf16 cast done in the wrapper (layout plumbing).
        pts_t = jnp.transpose(pts, (0, 2, 1)).astype(jnp.bfloat16)
        logits, scores = confidence_pointnet_pallas(pts_t, self.params)
        data_dict['pred_confidence'] = logits
        data_dict['pred_score'] = scores                            # sigmoid fused in-kernel
        # eval-mode post processing: scores stay on device; host transfer /
        # per-object dict expansion is deferred to the caller and batched
        # across frames (no blocking device->host copy on the forward path).
        pred_dicts = [{'pred_score': scores}]
        recall_dict = {}
        return pred_dicts, recall_dict, {}


if __name__ == "__main__":
    key = jax.random.PRNGKey(0)
    k_pts, k_model = jax.random.split(key)

    pts = jax.random.normal(k_pts, (B, N, C_IN), jnp.float32)
    model = RefineTemplateJax(k_model)

    data_dict = {'points': pts}
    pred_dicts, recall_dict, _ = model.forward(data_dict)
    logits = jax.block_until_ready(data_dict['pred_confidence'])
    scores = jax.block_until_ready(data_dict['pred_score'])

    ref_logits, ref_scores = confidence_pointnet_ref(pts, model.params)
    ref_logits = jax.block_until_ready(ref_logits)
    ref_scores = jax.block_until_ready(ref_scores)

    if not jnp.allclose(logits, ref_logits, atol=1e-3, rtol=1e-3):
        raise AssertionError(f"Pallas logits mismatch:\n{logits}\nvs\n{ref_logits}")
    if not jnp.allclose(scores, ref_scores, atol=1e-3, rtol=1e-3):
        raise AssertionError(f"Pallas scores mismatch:\n{scores}\nvs\n{ref_scores}")

    print("KERNEL_OK")
</pallas_src>

<mosaic_0001>
module attributes {stable_mosaic.version = 11 : i64} {
  func.func @_confidence_pointnet_kernel(%arg0: i32, %arg1: i32, %arg2: memref<1x4x512xbf16, #tpu.memory_space<vmem>>, %arg3: memref<32x4xbf16, #tpu.memory_space<vmem>>, %arg4: memref<32x1xf32, #tpu.memory_space<vmem>>, %arg5: memref<64x32xbf16, #tpu.memory_space<vmem>>, %arg6: memref<64x1xf32, #tpu.memory_space<vmem>>, %arg7: memref<128x64xbf16, #tpu.memory_space<vmem>>, %arg8: memref<128x1xf32, #tpu.memory_space<vmem>>, %arg9: memref<128x1xf32, #tpu.memory_space<vmem>>, %arg10: memref<1x1xf32, #tpu.memory_space<smem>>, %arg11: memref<1x2x128xf32, #tpu.memory_space<vmem>>, %arg12: memref<128x512xf32, #tpu.memory_space<vmem>>) attributes {dimension_semantics = [#tpu.dimension_semantics<parallel>, #tpu.dimension_semantics<arbitrary>], iteration_bounds = array<i64: 4, 2>, scalar_prefetch = 0 : i64, scratch_operands = 1 : i64, tpu.core_type = #tpu.core_type<tc>, window_params = [{transform_indices = @transform_0, window_bounds = array<i64: 1, 4, 512>}, {pipeline_mode = #tpu.pipeline_mode<synchronous>, transform_indices = @transform_1, window_bounds = array<i64: 32, 4>}, {pipeline_mode = #tpu.pipeline_mode<synchronous>, transform_indices = @transform_2, window_bounds = array<i64: 32, 1>}, {pipeline_mode = #tpu.pipeline_mode<synchronous>, transform_indices = @transform_3, window_bounds = array<i64: 64, 32>}, {pipeline_mode = #tpu.pipeline_mode<synchronous>, transform_indices = @transform_4, window_bounds = array<i64: 64, 1>}, {pipeline_mode = #tpu.pipeline_mode<synchronous>, transform_indices = @transform_5, window_bounds = array<i64: 128, 64>}, {pipeline_mode = #tpu.pipeline_mode<synchronous>, transform_indices = @transform_6, window_bounds = array<i64: 128, 1>}, {pipeline_mode = #tpu.pipeline_mode<synchronous>, transform_indices = @transform_7, window_bounds = array<i64: 128, 1>}, {transform_indices = @transform_8, window_bounds = array<i64: 1, 1>}, {transform_indices = @transform_9, window_bounds = array<i64: 1, 2, 128>}]} {
    %c0 = arith.constant 0 : index
    %c0_0 = arith.constant 0 : index
    %c0_1 = arith.constant 0 : index
    %0 = vector.load %arg2[%c0, %c0_0, %c0_1] : memref<1x4x512xbf16, #tpu.memory_space<vmem>>, vector<1x4x512xbf16>
    %1 = vector.shape_cast %0 : vector<1x4x512xbf16> to vector<4x512xbf16>
    %c0_2 = arith.constant 0 : index
    %c0_3 = arith.constant 0 : index
    %2 = vector.load %arg3[%c0_2, %c0_3] : memref<32x4xbf16, #tpu.memory_space<vmem>>, vector<32x4xbf16>
    %cst = arith.constant dense<0.000000e+00> : vector<32x512xf32>
    %3 = tpu.matmul %2, %1, %cst {dimension_numbers = #tpu.dot_dimension_numbers<[1], [0], [0], [1], [0, 0, 1, 1], [], []>} : vector<32x4xbf16>, vector<4x512xbf16>, vector<32x512xf32> -> vector<32x512xf32>
    %c0_4 = arith.constant 0 : index
    %c0_5 = arith.constant 0 : index
    %4 = vector.load %arg4[%c0_4, %c0_5] : memref<32x1xf32, #tpu.memory_space<vmem>>, vector<32x1xf32>
    %5 = vector.broadcast %4 : vector<32x1xf32> to vector<32x512xf32>
    %6 = arith.addf %3, %5 : vector<32x512xf32>
    %cst_6 = arith.constant 0.000000e+00 : f32
    %7 = vector.broadcast %cst_6 : f32 to vector<32x512xf32>
    %8 = arith.maximumf %6, %7 : vector<32x512xf32>
    %c0_7 = arith.constant 0 : index
    %c0_8 = arith.constant 0 : index
    %9 = vector.load %arg5[%c0_7, %c0_8] : memref<64x32xbf16, #tpu.memory_space<vmem>>, vector<64x32xbf16>
    %10 = arith.truncf %8 : vector<32x512xf32> to vector<32x512xbf16>
    %cst_9 = arith.constant dense<0.000000e+00> : vector<64x512xf32>
    %11 = tpu.matmul %9, %10, %cst_9 {dimension_numbers = #tpu.dot_dimension_numbers<[1], [0], [0], [1], [0, 0, 1, 1], [], []>} : vector<64x32xbf16>, vector<32x512xbf16>, vector<64x512xf32> -> vector<64x512xf32>
    %c0_10 = arith.constant 0 : index
    %c0_11 = arith.constant 0 : index
    %12 = vector.load %arg6[%c0_10, %c0_11] : memref<64x1xf32, #tpu.memory_space<vmem>>, vector<64x1xf32>
    %13 = vector.broadcast %12 : vector<64x1xf32> to vector<64x512xf32>
    %14 = arith.addf %11, %13 : vector<64x512xf32>
    %cst_12 = arith.constant 0.000000e+00 : f32
    %15 = vector.broadcast %cst_12 : f32 to vector<64x512xf32>
    %16 = arith.maximumf %14, %15 : vector<64x512xf32>
    %c0_13 = arith.constant 0 : index
    %c0_14 = arith.constant 0 : index
    %17 = vector.load %arg7[%c0_13, %c0_14] : memref<128x64xbf16, #tpu.memory_space<vmem>>, vector<128x64xbf16>
    %18 = arith.truncf %16 : vector<64x512xf32> to vector<64x512xbf16>
    %cst_15 = arith.constant dense<0.000000e+00> : vector<128x512xf32>
    %19 = tpu.matmul %17, %18, %cst_15 {dimension_numbers = #tpu.dot_dimension_numbers<[1], [0], [0], [1], [0, 0, 1, 1], [], []>} : vector<128x64xbf16>, vector<64x512xbf16>, vector<128x512xf32> -> vector<128x512xf32>
    %c0_16 = arith.constant 0 : index
    %c0_17 = arith.constant 0 : index
    %20 = vector.load %arg8[%c0_16, %c0_17] : memref<128x1xf32, #tpu.memory_space<vmem>>, vector<128x1xf32>
    %21 = vector.broadcast %20 : vector<128x1xf32> to vector<128x512xf32>
    %22 = arith.addf %19, %21 : vector<128x512xf32>
    %cst_18 = arith.constant 0.000000e+00 : f32
    %23 = vector.broadcast %cst_18 : f32 to vector<128x512xf32>
    %24 = arith.maximumf %22, %23 : vector<128x512xf32>
    %c0_i32 = arith.constant 0 : i32
    %25 = arith.cmpi eq, %arg1, %c0_i32 : i32
    %26 = arith.extui %25 : i1 to i32
    %c0_i32_19 = arith.constant 0 : i32
    %27 = arith.cmpi ne, %26, %c0_i32_19 : i32
    scf.if %27 {
      %c0_23 = arith.constant 0 : index
      %c0_24 = arith.constant 0 : index
      %34 = vector.load %arg12[%c0_23, %c0_24] : memref<128x512xf32, #tpu.memory_space<vmem>>, vector<128x512xf32>
      tpu.vector_store %arg12[%c0_23, %c0_24], %24 {strides = array<i32>} : memref<128x512xf32, #tpu.memory_space<vmem>>, vector<128x512xf32>,
    } else {
    }
    %c0_i32_20 = arith.constant 0 : i32
    %28 = arith.cmpi sgt, %arg1, %c0_i32_20 : i32
    %29 = arith.extui %28 : i1 to i32
    %c0_i32_21 = arith.constant 0 : i32
    %30 = arith.cmpi ne, %29, %c0_i32_21 : i32
    scf.if %30 {
      %c0_23 = arith.constant 0 : index
      %c0_24 = arith.constant 0 : index
      %34 = vector.load %arg12[%c0_23, %c0_24] : memref<128x512xf32, #tpu.memory_space<vmem>>, vector<128x512xf32>
      %35 = arith.maximumf %34, %24 : vector<128x512xf32>
      %c0_25 = arith.constant 0 : index
      %c0_26 = arith.constant 0 : index
      %36 = vector.load %arg12[%c0_25, %c0_26] : memref<128x512xf32, #tpu.memory_space<vmem>>, vector<128x512xf32>
      tpu.vector_store %arg12[%c0_25, %c0_26], %35 {strides = array<i32>} : memref<128x512xf32, #tpu.memory_space<vmem>>, vector<128x512xf32>,
    } else {
    }
    %c1_i32 = arith.constant 1 : i32
    %31 = arith.cmpi eq, %arg1, %c1_i32 : i32
    %32 = arith.extui %31 : i1 to i32
    %c0_i32_22 = arith.constant 0 : i32
    %33 = arith.cmpi ne, %32, %c0_i32_22 : i32
    scf.if %33 {
      %c0_23 = arith.constant 0 : index
      %c0_24 = arith.constant 0 : index
      %34 = vector.load %arg12[%c0_23, %c0_24] : memref<128x512xf32, #tpu.memory_space<vmem>>, vector<128x512xf32>
      %cst_25 = arith.constant dense<0xFF800000> : vector<128xf32>
      %35 = vector.multi_reduction <maximumf>, %34, %cst_25 [1] : vector<128x512xf32> to vector<128xf32>
      %36 = vector.shape_cast %35 : vector<128xf32> to vector<128x1xf32>
      %c0_26 = arith.constant 0 : index
      %c0_27 = arith.constant 0 : index
      %37 = vector.load %arg9[%c0_26, %c0_27] : memref<128x1xf32, #tpu.memory_space<vmem>>, vector<128x1xf32>
      %38 = arith.mulf %36, %37 : vector<128x1xf32>
      %cst_28 = arith.constant dense<0.000000e+00> : vector<1xf32>
      %39 = vector.multi_reduction <add>, %38, %cst_28 [0] : vector<128x1xf32> to vector<1xf32>
      %40 = vector.shape_cast %39 : vector<1xf32> to vector<1x1xf32>
      %c0_29 = arith.constant 0 : index
      %c0_30 = arith.constant 0 : index
      %41 = memref.load %arg10[%c0_29, %c0_30] : memref<1x1xf32, #tpu.memory_space<smem>>
      %42 = vector.broadcast %41 : f32 to vector<1x1xf32>
      %43 = arith.addf %40, %42 : vector<1x1xf32>
      %44 = arith.negf %43 : vector<1x1xf32>
      %45 = math.exp %44 : vector<1x1xf32>
      %cst_31 = arith.constant 1.000000e+00 : f32
      %46 = vector.broadcast %cst_31 : f32 to vector<1x1xf32>
      %47 = arith.addf %46, %45 : vector<1x1xf32>
      %48 = arith.divf %46, %47 : vector<1x1xf32>
      %49 = tpu.concatenate %43, %48 in 0 : vector<1x1xf32>, vector<1x1xf32> -> vector<2x1xf32>
      %50 = vector.shape_cast %49 : vector<2x1xf32> to vector<2x1xf32>
      %51 = vector.broadcast %50 : vector<2x1xf32> to vector<2x128xf32>
      %c0_32 = arith.constant 0 : index
      %c0_33 = arith.constant 0 : index
      %c0_34 = arith.constant 0 : index
      %52 = vector.load %arg11[%c0_32, %c0_33, %c0_34] : memref<1x2x128xf32, #tpu.memory_space<vmem>>, vector<1x2x128xf32>
      %53 = vector.shape_cast %52 : vector<1x2x128xf32> to vector<2x128xf32>
      %54 = vector.shape_cast %51 : vector<2x128xf32> to vector<1x2x128xf32>
      tpu.vector_store %arg11[%c0_32, %c0_33, %c0_34], %54 {strides = array<i32>} : memref<1x2x128xf32, #tpu.memory_space<vmem>>, vector<1x2x128xf32>,
    } else {
    }
    return
  }
  func.func @transform_0(%arg0: i32, %arg1: i32) -> (i32, i32, i32) {
    %c0_i32 = arith.constant 0 : i32
    %c0_i32_0 = arith.constant 0 : i32
    return %arg0, %c0_i32, %arg1 : i32, i32, i32
  }
  func.func @transform_1(%arg0: i32, %arg1: i32) -> (i32, i32) {
    %c0_i32 = arith.constant 0 : i32
    %c0_i32_0 = arith.constant 0 : i32
    %c0_i32_1 = arith.constant 0 : i32
    return %c0_i32, %c0_i32_0 : i32, i32
  }
  func.func @transform_2(%arg0: i32, %arg1: i32) -> (i32, i32) {
    %c0_i32 = arith.constant 0 : i32
    %c0_i32_0 = arith.constant 0 : i32
    %c0_i32_1 = arith.constant 0 : i32
    return %c0_i32, %c0_i32_0 : i32, i32
  }
  func.func @transform_3(%arg0: i32, %arg1: i32) -> (i32, i32) {
    %c0_i32 = arith.constant 0 : i32
    %c0_i32_0 = arith.constant 0 : i32
    %c0_i32_1 = arith.constant 0 : i32
    return %c0_i32, %c0_i32_0 : i32, i32
  }
  func.func @transform_4(%arg0: i32, %arg1: i32) -> (i32, i32) {
    %c0_i32 = arith.constant 0 : i32
    %c0_i32_0 = arith.constant 0 : i32
    %c0_i32_1 = arith.constant 0 : i32
    return %c0_i32, %c0_i32_0 : i32, i32
  }
  func.func @transform_5(%arg0: i32, %arg1: i32) -> (i32, i32) {
    %c0_i32 = arith.constant 0 : i32
    %c0_i32_0 = arith.constant 0 : i32
    %c0_i32_1 = arith.constant 0 : i32
    return %c0_i32, %c0_i32_0 : i32, i32
  }
  func.func @transform_6(%arg0: i32, %arg1: i32) -> (i32, i32) {
    %c0_i32 = arith.constant 0 : i32
    %c0_i32_0 = arith.constant 0 : i32
    %c0_i32_1 = arith.constant 0 : i32
    return %c0_i32, %c0_i32_0 : i32, i32
  }
  func.func @transform_7(%arg0: i32, %arg1: i32) -> (i32, i32) {
    %c0_i32 = arith.constant 0 : i32
    %c0_i32_0 = arith.constant 0 : i32
    %c0_i32_1 = arith.constant 0 : i32
    return %c0_i32, %c0_i32_0 : i32, i32
  }
  func.func @transform_8(%arg0: i32, %arg1: i32) -> (i32, i32) {
    %c0_i32 = arith.constant 0 : i32
    %c0_i32_0 = arith.constant 0 : i32
    %c0_i32_1 = arith.constant 0 : i32
    return %c0_i32, %c0_i32_0 : i32, i32
  }
  func.func @transform_9(%arg0: i32, %arg1: i32) -> (i32, i32, i32) {
    %c0_i32 = arith.constant 0 : i32
    %c0_i32_0 = arith.constant 0 : i32
    %c0_i32_1 = arith.constant 0 : i32
    return %arg0, %c0_i32, %c0_i32_0 : i32, i32, i32
  }
}

</mosaic_0001>

<llo_original>
// kernel: tpu_custom_call.1
$region0: #{tpu_custom_call.1}
  #allocation0 [shape = 'u32[]', space=smem, size = 0x4, offset = 0x4, fixed_abs, tag = 'smem constant byte address 0x4 - core index']
  #allocation1 [shape = 'u32[144,128]{1,0:T(1,128)}', space=vmem, size = 0x12000, scoped, tag = 'internal scratch']
  #allocation2 [shape = 'f32[128,512]{1,0:T(8,128)}', space=vmem, size = 0x40000, scoped, tag = 'scratch operand']
  #allocation3 [shape = 'f32[1,1]{1,0:T(1,128)S(6)}', space=smem, size = 0x200, scoped, tag = 'scoped memory for tpu_custom_call.1']
  %s0 = inlined_call_operand.vmem [shape: bf16[4,4,1024], index: 0, kind: input, shape index: {}]
  %s1 = inlined_call_operand.vmem [shape: bf16[32,4], index: 1, kind: input, shape index: {}]
  %s2 = inlined_call_operand.vmem [shape: f32[32,1], index: 2, kind: input, shape index: {}]
  %s3 = inlined_call_operand.vmem [shape: bf16[64,32], index: 3, kind: input, shape index: {}]
  %s4 = inlined_call_operand.vmem [shape: f32[64,1], index: 4, kind: input, shape index: {}]
  %s5 = inlined_call_operand.vmem [shape: bf16[128,64], index: 5, kind: input, shape index: {}]
  %s6 = inlined_call_operand.vmem [shape: f32[128,1], index: 6, kind: input, shape index: {}]
  %s7 = inlined_call_operand.vmem [shape: f32[128,1], index: 7, kind: input, shape index: {}]
  %s8 = inlined_call_operand.<no memory space> [shape: f32[1,1], index: 8, kind: input, shape index: {}]
  %s9 = inlined_call_operand.hbm [shape: f32[4,2,128], index: 9, kind: output, shape index: {}]
  %s10 = sld [smem:[#allocation0]]
  $region81: #{tpu_custom_call.1} parent=0
    _
  %s12 = ssub.s32 1, %s10
  %s13 = scalar_select 0, %s12, %s10
  %14 = sst [smem:[#allocation3]] %s8
  $region1: #{tpu_custom_call.1} parent=0
    #allocation4 [shape = 'u8[2048]{0}', space=vmem, size = 0x800, scoped, tag = 'output window, operand 0']
    #allocation5 [shape = 's32[2]{0}', space=sflag, size = 0x8, scoped, tag = 'scoped memory for tpu_custom_call.1']
    %15 = vsyncpa [#allocation5], 0
    %s16 = scalar_lea.sflag [#allocation5], 1
    %17 = vsyncpa %s16, 0
    loop: start=0, step=1, limit=10
    $region2: #{tpu_custom_call.1} parent=1 // loop_pre_header
      _
    $region3: #{tpu_custom_call.1} parent=1 // loop_header
      %s19 = sphi 0, %s23
      %p20 = scmp.ge.s32.totalorder %s19, 10
      %s26 = sphi 0, %s38
      %s27 = sphi 0, %s34
      %s28 = sphi 0, %s26
      %s29 = sphi 0, %s27
      %s30 = sphi 0, %s28
      %s31 = sphi 0, %s29
      %s43 = sphi 0, %s45
      %s46 = sphi 0, %s43
      %s47 = sphi 0, %s46
      %s63 = sphi 0, %s47
      %s67 = sphi 0, %s67
      %s69 = sphi 0, %s67
      %s70 = sphi 0, %s69
      %s84 = sphi 0, %s70
      %s88 = sphi 0, %s88
      %s90 = sphi 0, %s88
      %s91 = sphi 0, %s90
      %s105 = sphi 0, %s91
      %s109 = sphi 0, %s109
      %s111 = sphi 0, %s109
      %s112 = sphi 0, %s111
      %s126 = sphi 0, %s112
      %s130 = sphi 0, %s130
      %s132 = sphi 0, %s130
      %s133 = sphi 0, %s132
      %s147 = sphi 0, %s133
      %s151 = sphi 0, %s151
      %s153 = sphi 0, %s151
      %s154 = sphi 0, %s153
      %s168 = sphi 0, %s154
      %s172 = sphi 0, %s172
      %s174 = sphi 0, %s172
      %s175 = sphi 0, %s174
      %s189 = sphi 0, %s175
      %s193 = sphi 0, %s193
      %s195 = sphi 0, %s193
      %s196 = sphi 0, %s195
      %s210 = sphi 0, %s196
      %s214 = sphi 0, %s214
      %s216 = sphi 0, %s214
      %s217 = sphi 0, %s216
      %s231 = sphi 0, %s217
      %s237 = sphi 0, %s239
      %s240 = sphi 0, %s237
      %s241 = sphi 0, %s240
      %s257 = sphi 0, %s241
    $region4: #{tpu_custom_call.1} parent=1 // loop_header_branch
      %22 = sbr.rel (%p20) target = $region8
    $region5: #{tpu_custom_call.1} parent=1 // loop_body
      %s24 = ssub.s32 %s19, 1
      %s25 = ssub.s32 %s19, 2
      %s32 = sadd.s32 1, %s27
      %p33 = scmp.ge.s32.totalorder %s32, 2
      %s34 = scalar_select %p33, 0, %s32
      %s35 = sadd.s32 1, %s26
      %s36 = scalar_select %p33, %s35, %s26
      %p37 = scmp.ge.s32.totalorder %s36, 4
      %s38 = scalar_select %p37, 0, %s36
      %s39 = ssub.s32 %s26, %s38
      %s40 = ssub.s32 %s27, %s34
      %s41 = sor.u32 %s39, %s40
      %p42 = scmp.eq.s32.totalorder %s41, 0
      %s44 = sadd.s32 %s43, 1
      %s45 = scalar_select %p42, %s43, %s44
      %p48 = pneg %p42
      %p49 = scmp.eq.s32.totalorder %s19, 7
      %p50 = por %p48, %p49
      %p51 = scmp.ne.s32.totalorder %s43, %s46
      %p52 = scmp.eq.s32.totalorder %s19, 0
      %p53 = por %p51, %p52
      %p54 = scmp.ne.s32.totalorder %s43, %s46
      %p55 = scmp.eq.s32.totalorder %s24, 7
      %p56 = por %p54, %p55
      %p57 = scmp.ne.s32.totalorder %s46, %s47
      %p58 = scmp.eq.s32.totalorder %s24, 0
      %p59 = por %p57, %p58
      %p60 = scmp.ne.s32.totalorder %s46, %s47
      %p61 = scmp.eq.s32.totalorder %s25, 7
      %p62 = por %p60, %p61
      %p64 = scmp.ne.s32.totalorder %s47, %s63
      %p65 = scmp.eq.s32.totalorder %s25, 0
      %p66 = por %p64, %p65
      %s68 = sadd.s32 %s67, 1
      %p71 = scmp.eq.s32.totalorder %s19, 7
      %p72 = scmp.ne.s32.totalorder %s67, %s69
      %p73 = scmp.eq.s32.totalorder %s19, 0
      %p74 = por %p72, %p73
      %p75 = scmp.ne.s32.totalorder %s67, %s69
      %p76 = scmp.eq.s32.totalorder %s24, 7
      %p77 = por %p75, %p76
      %p78 = scmp.ne.s32.totalorder %s69, %s70
      %p79 = scmp.eq.s32.totalorder %s24, 0
      %p80 = por %p78, %p79
      %p81 = scmp.ne.s32.totalorder %s69, %s70
      %p82 = scmp.eq.s32.totalorder %s25, 7
      %p83 = por %p81, %p82
      %p85 = scmp.ne.s32.totalorder %s70, %s84
      %p86 = scmp.eq.s32.totalorder %s25, 0
      %p87 = por %p85, %p86
      %s89 = sadd.s32 %s88, 1
      %p92 = scmp.eq.s32.totalorder %s19, 7
      %p93 = scmp.ne.s32.totalorder %s88, %s90
      %p94 = scmp.eq.s32.totalorder %s19, 0
      %p95 = por %p93, %p94
      %p96 = scmp.ne.s32.totalorder %s88, %s90
      %p97 = scmp.eq.s32.totalorder %s24, 7
      %p98 = por %p96, %p97
      %p99 = scmp.ne.s32.totalorder %s90, %s91
      %p100 = scmp.eq.s32.totalorder %s24, 0
      %p101 = por %p99, %p100
      %p102 = scmp.ne.s32.totalorder %s90, %s91
      %p103 = scmp.eq.s32.totalorder %s25, 7
      %p104 = por %p102, %p103
      %p106 = scmp.ne.s32.totalorder %s91, %s105
      %p107 = scmp.eq.s32.totalorder %s25, 0
      %p108 = por %p106, %p107
      %s110 = sadd.s32 %s109, 1
      %p113 = scmp.eq.s32.totalorder %s19, 7
      %p114 = scmp.ne.s32.totalorder %s109, %s111
      %p115 = scmp.eq.s32.totalorder %s19, 0
      %p116 = por %p114, %p115
      %p117 = scmp.ne.s32.totalorder %s109, %s111
      %p118 = scmp.eq.s32.totalorder %s24, 7
      %p119 = por %p117, %p118
      %p120 = scmp.ne.s32.totalorder %s111, %s112
      %p121 = scmp.eq.s32.totalorder %s24, 0
      %p122 = por %p120, %p121
      %p123 = scmp.ne.s32.totalorder %s111, %s112
      %p124 = scmp.eq.s32.totalorder %s25, 7
      %p125 = por %p123, %p124
      %p127 = scmp.ne.s32.totalorder %s112, %s126
      %p128 = scmp.eq.s32.totalorder %s25, 0
      %p129 = por %p127, %p128
      %s131 = sadd.s32 %s130, 1
      %p134 = scmp.eq.s32.totalorder %s19, 7
      %p135 = scmp.ne.s32.totalorder %s130, %s132
      %p136 = scmp.eq.s32.totalorder %s19, 0
      %p137 = por %p135, %p136
      %p138 = scmp.ne.s32.totalorder %s130, %s132
      %p139 = scmp.eq.s32.totalorder %s24, 7
      %p140 = por %p138, %p139
      %p141 = scmp.ne.s32.totalorder %s132, %s133
      %p142 = scmp.eq.s32.totalorder %s24, 0
      %p143 = por %p141, %p142
      %p144 = scmp.ne.s32.totalorder %s132, %s133
      %p145 = scmp.eq.s32.totalorder %s25, 7
      %p146 = por %p144, %p145
      %p148 = scmp.ne.s32.totalorder %s133, %s147
      %p149 = scmp.eq.s32.totalorder %s25, 0
      %p150 = por %p148, %p149
      %s152 = sadd.s32 %s151, 1
      %p155 = scmp.eq.s32.totalorder %s19, 7
      %p156 = scmp.ne.s32.totalorder %s151, %s153
      %p157 = scmp.eq.s32.totalorder %s19, 0
      %p158 = por %p156, %p157
      %p159 = scmp.ne.s32.totalorder %s151, %s153
      %p160 = scmp.eq.s32.totalorder %s24, 7
      %p161 = por %p159, %p160
      %p162 = scmp.ne.s32.totalorder %s153, %s154
      %p163 = scmp.eq.s32.totalorder %s24, 0
      %p164 = por %p162, %p163
      %p165 = scmp.ne.s32.totalorder %s153, %s154
      %p166 = scmp.eq.s32.totalorder %s25, 7
      %p167 = por %p165, %p166
      %p169 = scmp.ne.s32.totalorder %s154, %s168
      %p170 = scmp.eq.s32.totalorder %s25, 0
      %p171 = por %p169, %p170
      %s173 = sadd.s32 %s172, 1
      %p176 = scmp.eq.s32.totalorder %s19, 7
      %p177 = scmp.ne.s32.totalorder %s172, %s174
      %p178 = scmp.eq.s32.totalorder %s19, 0
      %p179 = por %p177, %p178
      %p180 = scmp.ne.s32.totalorder %s172, %s174
      %p181 = scmp.eq.s32.totalorder %s24, 7
      %p182 = por %p180, %p181
      %p183 = scmp.ne.s32.totalorder %s174, %s175
      %p184 = scmp.eq.s32.totalorder %s24, 0
      %p185 = por %p183, %p184
      %p186 = scmp.ne.s32.totalorder %s174, %s175
      %p187 = scmp.eq.s32.totalorder %s25, 7
      %p188 = por %p186, %p187
      %p190 = scmp.ne.s32.totalorder %s175, %s189
      %p191 = scmp.eq.s32.totalorder %s25, 0
      %p192 = por %p190, %p191
      %s194 = sadd.s32 %s193, 1
      %p197 = scmp.eq.s32.totalorder %s19, 7
      %p198 = scmp.ne.s32.totalorder %s193, %s195
      %p199 = scmp.eq.s32.totalorder %s19, 0
      %p200 = por %p198, %p199
      %p201 = scmp.ne.s32.totalorder %s193, %s195
      %p202 = scmp.eq.s32.totalorder %s24, 7
      %p203 = por %p201, %p202
      %p204 = scmp.ne.s32.totalorder %s195, %s196
      %p205 = scmp.eq.s32.totalorder %s24, 0
      %p206 = por %p204, %p205
      %p207 = scmp.ne.s32.totalorder %s195, %s196
      %p208 = scmp.eq.s32.totalorder %s25, 7
      %p209 = por %p207, %p208
      %p211 = scmp.ne.s32.totalorder %s196, %s210
      %p212 = scmp.eq.s32.totalorder %s25, 0
      %p213 = por %p211, %p212
      %s215 = sadd.s32 %s214, 1
      %p218 = scmp.eq.s32.totalorder %s19, 7
      %p219 = scmp.ne.s32.totalorder %s214, %s216
      %p220 = scmp.eq.s32.totalorder %s19, 0
      %p221 = por %p219, %p220
      %p222 = scmp.ne.s32.totalorder %s214, %s216
      %p223 = scmp.eq.s32.totalorder %s24, 7
      %p224 = por %p222, %p223
      %p225 = scmp.ne.s32.totalorder %s216, %s217
      %p226 = scmp.eq.s32.totalorder %s24, 0
      %p227 = por %p225, %p226
      %p228 = scmp.ne.s32.totalorder %s216, %s217
      %p229 = scmp.eq.s32.totalorder %s25, 7
      %p230 = por %p228, %p229
      %p232 = scmp.ne.s32.totalorder %s217, %s231
      %p233 = scmp.eq.s32.totalorder %s25, 0
      %p234 = por %p232, %p233
      %s235 = ssub.s32 %s26, %s38
      %p236 = scmp.eq.s32.totalorder %s235, 0
      %s238 = sadd.s32 %s237, 1
      %s239 = scalar_select %p236, %s237, %s238
      %p242 = pneg %p236
      %p243 = scmp.eq.s32.totalorder %s19, 7
      %p244 = por %p242, %p243
      %p245 = scmp.ne.s32.totalorder %s237, %s240
      %p246 = scmp.eq.s32.totalorder %s19, 0
      %p247 = por %p245, %p246
      %p248 = scmp.ne.s32.totalorder %s237, %s240
      %p249 = scmp.eq.s32.totalorder %s24, 7
      %p250 = por %p248, %p249
      %p251 = scmp.ne.s32.totalorder %s240, %s241
      %p252 = scmp.eq.s32.totalorder %s24, 0
      %p253 = por %p251, %p252
      %p254 = scmp.ne.s32.totalorder %s240, %s241
      %p255 = scmp.eq.s32.totalorder %s25, 7
      %p256 = por %p254, %p255
      %p258 = scmp.ne.s32.totalorder %s241, %s257
      %p259 = scmp.eq.s32.totalorder %s25, 0
      %p260 = por %p258, %p259
      %p261 = scmp.le.s32.totalorder 1, %s19
      %p262 = scmp.lt.s32.totalorder %s19, 9
      %p263 = pnand %p261, %p262
      %p264 = pneg %p263
      // Predicated region
      $region9: #{tpu_custom_call.1} parent=5 // pred_check
        _
      $region10: #{tpu_custom_call.1} parent=5 // pred_check_branch
        %266 = sbr.rel (%p263) target = $region12
      $region11: #{tpu_custom_call.1} parent=5 // pred_region
        %s267 = ssub.s32 %s19, 1
        // Predicated region
        $region13: #{tpu_custom_call.1} parent=11 // pred_check
          %p268 = pneg %p80
        $region14: #{tpu_custom_call.1} parent=11 // pred_check_branch
          %270 = sbr.rel (%p268) target = $region16
        $region15: #{tpu_custom_call.1} parent=11 // pred_region
          _
        $region16: #{tpu_custom_call.1} parent=11 // pred_fallthru
          _
        // Predicated region
        $region17: #{tpu_custom_call.1} parent=11 // pred_check
          %p271 = pneg %p101
        $region18: #{tpu_custom_call.1} parent=11 // pred_check_branch
          %273 = sbr.rel (%p271) target = $region20
        $region19: #{tpu_custom_call.1} parent=11 // pred_region
          _
        $region20: #{tpu_custom_call.1} parent=11 // pred_fallthru
          _
        // Predicated region
        $region21: #{tpu_custom_call.1} parent=11 // pred_check
          %p274 = pneg %p122
        $region22: #{tpu_custom_call.1} parent=11 // pred_check_branch
          %276 = sbr.rel (%p274) target = $region24
        $region23: #{tpu_custom_call.1} parent=11 // pred_region
          _
        $region24: #{tpu_custom_call.1} parent=11 // pred_fallthru
          _
        // Predicated region
        $region25: #{tpu_custom_call.1} parent=11 // pred_check
          %p277 = pneg %p143
        $region26: #{tpu_custom_call.1} parent=11 // pred_check_branch
          %279 = sbr.rel (%p277) target = $region28
        $region27: #{tpu_custom_call.1} parent=11 // pred_region
          _
        $region28: #{tpu_custom_call.1} parent=11 // pred_fallthru
          _
        // Predicated region
        $region29: #{tpu_custom_call.1} parent=11 // pred_check
          %p280 = pneg %p164
        $region30: #{tpu_custom_call.1} parent=11 // pred_check_branch
          %282 = sbr.rel (%p280) target = $region32
        $region31: #{tpu_custom_call.1} parent=11 // pred_region
          _
        $region32: #{tpu_custom_call.1} parent=11 // pred_fallthru
          _
        // Predicated region
        $region33: #{tpu_custom_call.1} parent=11 // pred_check
          %p283 = pneg %p185
        $region34: #{tpu_custom_call.1} parent=11 // pred_check_branch
          %285 = sbr.rel (%p283) target = $region36
        $region35: #{tpu_custom_call.1} parent=11 // pred_region
          _
        $region36: #{tpu_custom_call.1} parent=11 // pred_fallthru
          _
        // Predicated region
        $region37: #{tpu_custom_call.1} parent=11 // pred_check
          %p286 = pneg %p206
        $region38: #{tpu_custom_call.1} parent=11 // pred_check_branch
          %288 = sbr.rel (%p286) target = $region40
        $region39: #{tpu_custom_call.1} parent=11 // pred_region
          _
        $region40: #{tpu_custom_call.1} parent=11 // pred_fallthru
          _
        // Predicated region
        $region41: #{tpu_custom_call.1} parent=11 // pred_check
          %p289 = pneg %p227
        $region42: #{tpu_custom_call.1} parent=11 // pred_check_branch
          %291 = sbr.rel (%p289) target = $region44
        $region43: #{tpu_custom_call.1} parent=11 // pred_region
          _
        $region44: #{tpu_custom_call.1} parent=11 // pred_fallthru
          _
      $region12: #{tpu_custom_call.1} parent=5 // pred_fallthru
        _
      %p292 = scmp.lt.s32.totalorder %s19, 8
      // Predicated region
      $region45: #{tpu_custom_call.1} parent=5 // pred_check
        %p293 = pneg %p292
      $region46: #{tpu_custom_call.1} parent=5 // pred_check_branch
        %295 = sbr.rel (%p293) target = $region48
      $region47: #{tpu_custom_call.1} parent=5 // pred_region
        // Predicated region
        $region49: #{tpu_custom_call.1} parent=47 // pred_check
          %p296 = pneg %p53
        $region50: #{tpu_custom_call.1} parent=47 // pred_check_branch
          %298 = sbr.rel (%p296) target = $region52
        $region51: #{tpu_custom_call.1} parent=47 // pred_region
          %s299 = smul.u32 4, %s27
          %p300 = scmp.lt.s32.totalorder %s26, 3
          %s301 = scalar_select %p300, %s26, 3
          %p302 = scmp.lt.s32.totalorder %s299, 7
          %s303 = scalar_select %p302, %s299, 7
          %s304 = smul.addr %s301, 8
          %s305 = sadd.s32 %s303, %s304
          %s306 = smul.addr %s305, 2
          %s307 = scalar_lea.vmem %s0, %s306
          %s308 = smul.u32 4, %s27
        $region52: #{tpu_custom_call.1} parent=47 // pred_fallthru
          _
      $region48: #{tpu_custom_call.1} parent=5 // pred_fallthru
        _
      %p309 = scmp.le.s32.totalorder 1, %s19
      %p310 = scmp.lt.s32.totalorder %s19, 9
      %p311 = pnand %p309, %p310
      %p312 = pneg %p311
      // Predicated region
      $region53: #{tpu_custom_call.1} parent=5 // pred_check
        _
      $region54: #{tpu_custom_call.1} parent=5 // pred_check_branch
        %314 = sbr.rel (%p311) target = $region56
      $region55: #{tpu_custom_call.1} parent=5 // pred_region
        %s315 = ssub.s32 %s19, 1
        %s316 = smul.u32 4, %s29
        %p317 = scmp.lt.s32.totalorder %s28, 3
        %s318 = scalar_select %p317, %s28, 3
        %p319 = scmp.lt.s32.totalorder %s316, 7
        %s320 = scalar_select %p319, %s316, 7
        %s321 = smul.addr %s318, 8
        %s322 = sadd.s32 %s320, %s321
        %s323 = smul.addr %s322, 2
        %s324 = scalar_lea.vmem %s0, %s323
        %p325 = pneg %p59
        %p326 = pneg %p56
        %p327 = pneg %p80
        %p328 = pneg %p77
        %p329 = pneg %p101
        %p330 = pneg %p98
        %p331 = pneg %p122
        %p332 = pneg %p119
        %p333 = pneg %p143
        %p334 = pneg %p140
        %p335 = pneg %p164
        %p336 = pneg %p161
        %p337 = pneg %p185
        %p338 = pneg %p182
        %p339 = pneg %p206
        %p340 = pneg %p203
        %p341 = pneg %p227
        %p342 = pneg %p224
        %p343 = pneg %p253
        %p344 = pneg %p250
        %s345 = sand.u32 %s240, 1
        %s346 = scalar_lea.sflag [#allocation5], %s345
        %s347 = sand.u32 %s240, 1
        %s348 = smul.addr %s347, 2
        %s349 = scalar_lea.vmem [#allocation4], %s348
        %s350 = smul.u32 4, %s29
        %p351 = scmp.lt.s32.totalorder %s28, 3
        %s352 = scalar_select %p351, %s28, 3
        %p353 = scmp.lt.s32.totalorder %s350, 7
        %s354 = scalar_select %p353, %s350, 7
        %s355 = smul.addr %s352, 8
        %s356 = sadd.s32 %s354, %s355
        %s357 = smul.addr %s356, 2
        %s358 = scalar_lea.vmem %s0, %s357
        %s359 = smul.u32 4, %s29
        %v361 = vld [vmem:[%s358] sm:$0xff]
        %v362 = vld [vmem:[%s1] sm:$0xf]
        %v363 = vld [vmem:[%s1 + $0x4] sm:$0xf]
        %v364 = vld [vmem:[%s1 + $0x8] sm:$0xf]
        %v365 = vld [vmem:[%s1 + $0xc] sm:$0xf]
        %v366 = vld [vmem:[%s2] sm:$0xff]
        %v367 = vld [vmem:[%s2 + $0x8] sm:$0xff]
        %v368 = vld [vmem:[%s2 + $0x10] sm:$0xff]
        %v369 = vld [vmem:[%s2 + $0x18] sm:$0xff]
        %371 = vset.pattern.permute.xlu0 0
        %372 = vperm.xlu0 %371, %v366
        %v373 = vpop.permute.xlu0 %372
        %376 = vset.pattern.permute.xlu0 0
        %377 = vperm.xlu0 %376, %v367
        %v378 = vpop.permute.xlu0 %377
        %381 = vset.pattern.permute.xlu0 0
        %382 = vperm.xlu0 %381, %v368
        %v383 = vpop.permute.xlu0 %382
        %386 = vset.pattern.permute.xlu0 0
        %387 = vperm.xlu0 %386, %v369
        %v388 = vpop.permute.xlu0 %387
        %v394 = vunpack.c.l.b16 %v362
        %v395 = vunpack.c.l.b16 %v363
        %v396 = vunpack.c.l.b16 %v364
        %v397 = vunpack.c.l.b16 %v365
        %v398 = vpack.c.b16 %v395, %v394
        %v399 = vpack.c.b16 %v397, %v396
        %v401 = vcombine.high %v361, %v361
        %v403 = vunpack.c.l.s4 1983009808
        %v404 = vunpack.c.0.s8 %v403
        %v405 = vlaneseq
        %v406 = vshrl.u32 %v405, 7
        %v407 = vsub.s32 %v404, %v406
        %v408 = vrot.slane %v361, %v407
        %v410 = vunpack.c.l.s4 1983009808
        %v411 = vunpack.c.0.s8 %v410
        %v412 = vlaneseq
        %v413 = vshrl.u32 %v412, 7
        %v414 = vsub.s32 %v411, %v413
        %v415 = vrot.slane %v401, %v414
        %v416 = vcombine.high %v408, %v408
        %v417 = vcombine.high %v415, %v415
        %vm418 = vcmask 31744
        %v420 = vsel %vm418, %v398, 0
        %v423 = vsel %vm418, %v399, 0
        %vm425 = vcmask 1041408
        %v427 = vsel %vm425, %v408, 0
        %v430 = vsel %vm425, %v416, 0
        %v433 = vsel %vm425, %v415, 0
        %v436 = vsel %vm425, %v417, 0
        %438 = vmatprep.subr.bf16.mxu0 %v430
        %439 = vmatpush1.bf16.msra.mxu0 %v427
        %440 = vmatprep.subr.bf16.mxu0 0
        %441 = vmatpush1.bf16.msra.mxu0 0
        %442 = vmatprep.subr.bf16.mxu0 0
        %443 = vmatpush1.bf16.msra.mxu0 0
        %444 = vmatprep.subr.bf16.mxu0 0
        %445 = vmatpush1.bf16.msra.mxu0 0
        %446 = vmatprep.subr.bf16.mxu0 0
        %447 = vmatpush1.bf16.msra.mxu0 0
        %448 = vmatprep.subr.bf16.mxu0 0
        %449 = vmatpush1.bf16.msra.mxu0 0
        %450 = vmatprep.subr.bf16.mxu0 0
        %451 = vmatpush1.bf16.msra.mxu0 0
        %452 = vmatprep.subr.bf16.mxu0 0
        %453 = vmatpush1.bf16.msra.mxu0 0
        %454 = vmatprep.subr.bf16.mxu0 0
        %455 = vmatpush1.bf16.msra.mxu0 0
        %456 = vmatprep.subr.bf16.mxu0 0
        %457 = vmatpush1.bf16.msra.mxu0 0
        %458 = vmatprep.subr.bf16.mxu0 0
        %459 = vmatpush1.bf16.msra.mxu0 0
        %460 = vmatprep.subr.bf16.mxu0 0
        %461 = vmatpush1.bf16.msra.mxu0 0
        %462 = vmatprep.subr.bf16.mxu0 0
        %463 = vmatpush1.bf16.msra.mxu0 0
        %464 = vmatprep.subr.bf16.mxu0 0
        %465 = vmatpush1.bf16.msra.mxu0 0
        %466 = vmatprep.subr.bf16.mxu0 0
        %467 = vmatpush1.bf16.msra.mxu0 0
        %468 = vmatprep.subr.bf16.mxu0 0
        %469 = vmatpush1.bf16.msra.mxu0 0
        %470 = vmatprep.mubr.bf16.mxu0 0
        %471 = vmatmul.mubr.bf16.gmra.mrb[0].mxu0 %v420
        %v472 = vpop.f32.mrb[0].mxu0
        %v473 = vadd.f32 %v373, %v472
        %v474 = vpop.f32.mrb[0].mxu0
        %v475 = vadd.f32 %v373, %v474
        %v476 = vpop.f32.mrb[0].mxu0
        %v477 = vadd.f32 %v378, %v476
        %v478 = vpop.f32.mrb[0].mxu0
        %v479 = vadd.f32 %v378, %v478
        %480 = vmatprep.mubr.bf16.mxu0 0
        %481 = vmatmul.mubr.bf16.gmra.mrb[0].mxu0 %v423
        %v482 = vpop.f32.mrb[0].mxu0
        %v483 = vadd.f32 %v383, %v482
        %v484 = vpop.f32.mrb[0].mxu0
        %v485 = vadd.f32 %v383, %v484
        %v486 = vpop.f32.mrb[0].mxu0
        %v487 = vadd.f32 %v388, %v486
        %v488 = vpop.f32.mrb[0].mxu0
        %v489 = vadd.f32 %v388, %v488
        %490 = vdwg.mxu0
        %491 = vmatprep.subr.bf16.mxu0 %v436
        %492 = vmatpush1.bf16.msra.mxu0 %v433
        %493 = vmatprep.subr.bf16.mxu0 0
        %494 = vmatpush1.bf16.msra.mxu0 0
        %495 = vmatprep.subr.bf16.mxu0 0
        %496 = vmatpush1.bf16.msra.mxu0 0
        %497 = vmatprep.subr.bf16.mxu0 0
        %498 = vmatpush1.bf16.msra.mxu0 0
        %499 = vmatprep.subr.bf16.mxu0 0
        %500 = vmatpush1.bf16.msra.mxu0 0
        %501 = vmatprep.subr.bf16.mxu0 0
        %502 = vmatpush1.bf16.msra.mxu0 0
        %503 = vmatprep.subr.bf16.mxu0 0
        %504 = vmatpush1.bf16.msra.mxu0 0
        %505 = vmatprep.subr.bf16.mxu0 0
        %506 = vmatpush1.bf16.msra.mxu0 0
        %507 = vmatprep.subr.bf16.mxu0 0
        %508 = vmatpush1.bf16.msra.mxu0 0
        %509 = vmatprep.subr.bf16.mxu0 0
        %510 = vmatpush1.bf16.msra.mxu0 0
        %511 = vmatprep.subr.bf16.mxu0 0
        %512 = vmatpush1.bf16.msra.mxu0 0
        %513 = vmatprep.subr.bf16.mxu0 0
        %514 = vmatpush1.bf16.msra.mxu0 0
        %515 = vmatprep.subr.bf16.mxu0 0
        %516 = vmatpush1.bf16.msra.mxu0 0
        %517 = vmatprep.subr.bf16.mxu0 0
        %518 = vmatpush1.bf16.msra.mxu0 0
        %519 = vmatprep.subr.bf16.mxu0 0
        %520 = vmatpush1.bf16.msra.mxu0 0
        %521 = vmatprep.subr.bf16.mxu0 0
        %522 = vmatpush1.bf16.msra.mxu0 0
        %523 = vmatprep.mubr.bf16.mxu0 0
        %524 = vmatmul.mubr.bf16.gmra.mrb[0].mxu0 %v420
        %v525 = vpop.f32.mrb[0].mxu0
        %v526 = vadd.f32 %v373, %v525
        %v527 = vpop.f32.mrb[0].mxu0
        %v528 = vadd.f32 %v373, %v527
        %v529 = vpop.f32.mrb[0].mxu0
        %v530 = vadd.f32 %v378, %v529
        %v531 = vpop.f32.mrb[0].mxu0
        %v532 = vadd.f32 %v378, %v531
        %533 = vmatprep.mubr.bf16.mxu0 0
        %534 = vmatmul.mubr.bf16.gmra.mrb[0].mxu0 %v423
        %v535 = vpop.f32.mrb[0].mxu0
        %v536 = vadd.f32 %v383, %v535
        %v537 = vpop.f32.mrb[0].mxu0
        %v538 = vadd.f32 %v383, %v537
        %v539 = vpop.f32.mrb[0].mxu0
        %v540 = vadd.f32 %v388, %v539
        %v541 = vpop.f32.mrb[0].mxu0
        %v542 = vadd.f32 %v388, %v541
        %543 = vdwg.mxu0
        %v544 = vmax.f32 %v473, 0.0
        %v545 = vmax.f32 %v475, 0.0
        %v546 = vmax.f32 %v526, 0.0
        %v547 = vmax.f32 %v528, 0.0
        %v548 = vmax.f32 %v477, 0.0
        %v549 = vmax.f32 %v479, 0.0
        %v550 = vmax.f32 %v530, 0.0
        %v551 = vmax.f32 %v532, 0.0
        %v552 = vmax.f32 %v483, 0.0
        %v553 = vmax.f32 %v485, 0.0
        %v554 = vmax.f32 %v536, 0.0
        %v555 = vmax.f32 %v538, 0.0
        %v556 = vmax.f32 %v487, 0.0
        %v557 = vmax.f32 %v489, 0.0
        %v558 = vmax.f32 %v540, 0.0
        %v559 = vmax.f32 %v542, 0.0
        %v560 = vld [vmem:[%s3] sm:$0xf]
        %v561 = vld [vmem:[%s3 + $0x4] sm:$0xf]
        %v562 = vld [vmem:[%s3 + $0x8] sm:$0xf]
        %v563 = vld [vmem:[%s3 + $0xc] sm:$0xf]
        %v564 = vld [vmem:[%s3 + $0x10] sm:$0xf]
        %v565 = vld [vmem:[%s3 + $0x14] sm:$0xf]
        %v566 = vld [vmem:[%s3 + $0x18] sm:$0xf]
        %v567 = vld [vmem:[%s3 + $0x1c] sm:$0xf]
        %v568 = vpack.c.bf16 %v548, %v544
        %v569 = vpack.c.bf16 %v549, %v545
        %v570 = vpack.c.bf16 %v550, %v546
        %v571 = vpack.c.bf16 %v551, %v547
        %v572 = vpack.c.bf16 %v556, %v552
        %v573 = vpack.c.bf16 %v557, %v553
        %v574 = vpack.c.bf16 %v558, %v554
        %v575 = vpack.c.bf16 %v559, %v555
        %v576 = vld [vmem:[%s4] sm:$0xff]
        %v577 = vld [vmem:[%s4 + $0x8] sm:$0xff]
        %v578 = vld [vmem:[%s4 + $0x10] sm:$0xff]
        %v579 = vld [vmem:[%s4 + $0x18] sm:$0xff]
        %v580 = vld [vmem:[%s4 + $0x20] sm:$0xff]
        %v581 = vld [vmem:[%s4 + $0x28] sm:$0xff]
        %v582 = vld [vmem:[%s4 + $0x30] sm:$0xff]
        %v583 = vld [vmem:[%s4 + $0x38] sm:$0xff]
        %585 = vset.pattern.permute.xlu0 0
        %586 = vperm.xlu0 %585, %v576
        %v587 = vpop.permute.xlu0 %586
        %590 = vset.pattern.permute.xlu0 0
        %591 = vperm.xlu0 %590, %v577
        %v592 = vpop.permute.xlu0 %591
        %595 = vset.pattern.permute.xlu0 0
        %596 = vperm.xlu0 %595, %v578
        %v597 = vpop.permute.xlu0 %596
        %600 = vset.pattern.permute.xlu0 0
        %601 = vperm.xlu0 %600, %v579
        %v602 = vpop.permute.xlu0 %601
        %605 = vset.pattern.permute.xlu0 0
        %606 = vperm.xlu0 %605, %v580
        %v607 = vpop.permute.xlu0 %606
        %610 = vset.pattern.permute.xlu0 0
        %611 = vperm.xlu0 %610, %v581
        %v612 = vpop.permute.xlu0 %611
        %615 = vset.pattern.permute.xlu0 0
        %616 = vperm.xlu0 %615, %v582
        %v617 = vpop.permute.xlu0 %616
        %620 = vset.pattern.permute.xlu0 0
        %621 = vperm.xlu0 %620, %v583
        %v622 = vpop.permute.xlu0 %621
        %v632 = vunpack.c.l.b16 %v560
        %v633 = vunpack.c.l.b16 %v561
        %v634 = vunpack.c.l.b16 %v562
        %v635 = vunpack.c.l.b16 %v563
        %v636 = vunpack.c.l.b16 %v564
        %v637 = vunpack.c.l.b16 %v565
        %v638 = vunpack.c.l.b16 %v566
        %v639 = vunpack.c.l.b16 %v567
        %v640 = vpack.c.b16 %v633, %v632
        %v641 = vpack.c.b16 %v635, %v634
        %v642 = vpack.c.b16 %v637, %v636
        %v643 = vpack.c.b16 %v639, %v638
        %vm644 = vcmask 261120
        %v646 = vsel %vm644, %v640, 0
        %v649 = vsel %vm644, %v641, 0
        %v652 = vsel %vm644, %v642, 0
        %v655 = vsel %vm644, %v643, 0
        %657 = vmatprep.subr.bf16.mxu0 %v569
        %658 = vmatpush1.bf16.msra.mxu0 %v568
        %659 = vmatprep.subr.bf16.mxu0 %v573
        %660 = vmatpush1.bf16.msra.mxu0 %v572
        %661 = vmatprep.subr.bf16.mxu0 0
        %662 = vmatpush1.bf16.msra.mxu0 0
        %663 = vmatprep.subr.bf16.mxu0 0
        %664 = vmatpush1.bf16.msra.mxu0 0
        %665 = vmatprep.subr.bf16.mxu0 0
        %666 = vmatpush1.bf16.msra.mxu0 0
        %667 = vmatprep.subr.bf16.mxu0 0
        %668 = vmatpush1.bf16.msra.mxu0 0
        %669 = vmatprep.subr.bf16.mxu0 0
        %670 = vmatpush1.bf16.msra.mxu0 0
        %671 = vmatprep.subr.bf16.mxu0 0
        %672 = vmatpush1.bf16.msra.mxu0 0
        %673 = vmatprep.subr.bf16.mxu0 0
        %674 = vmatpush1.bf16.msra.mxu0 0
        %675 = vmatprep.subr.bf16.mxu0 0
        %676 = vmatpush1.bf16.msra.mxu0 0
        %677 = vmatprep.subr.bf16.mxu0 0
        %678 = vmatpush1.bf16.msra.mxu0 0
        %679 = vmatprep.subr.bf16.mxu0 0
        %680 = vmatpush1.bf16.msra.mxu0 0
        %681 = vmatprep.subr.bf16.mxu0 0
        %682 = vmatpush1.bf16.msra.mxu0 0
        %683 = vmatprep.subr.bf16.mxu0 0
        %684 = vmatpush1.bf16.msra.mxu0 0
        %685 = vmatprep.subr.bf16.mxu0 0
        %686 = vmatpush1.bf16.msra.mxu0 0
        %687 = vmatprep.subr.bf16.mxu0 0
        %688 = vmatpush1.bf16.msra.mxu0 0
        %689 = vmatprep.mubr.bf16.mxu0 0
        %690 = vmatmul.mubr.bf16.gmra.mrb[0].mxu0 %v646
        %v691 = vpop.f32.mrb[0].mxu0
        %v692 = vadd.f32 %v587, %v691
        %v693 = vpop.f32.mrb[0].mxu0
        %v694 = vadd.f32 %v587, %v693
        %v695 = vpop.f32.mrb[0].mxu0
        %v696 = vadd.f32 %v592, %v695
        %v697 = vpop.f32.mrb[0].mxu0
        %v698 = vadd.f32 %v592, %v697
        %699 = vmatprep.mubr.bf16.mxu0 0
        %700 = vmatmul.mubr.bf16.gmra.mrb[0].mxu0 %v649
        %v701 = vpop.f32.mrb[0].mxu0
        %v702 = vadd.f32 %v597, %v701
        %v703 = vpop.f32.mrb[0].mxu0
        %v704 = vadd.f32 %v597, %v703
        %v705 = vpop.f32.mrb[0].mxu0
        %v706 = vadd.f32 %v602, %v705
        %v707 = vpop.f32.mrb[0].mxu0
        %v708 = vadd.f32 %v602, %v707
        %709 = vmatprep.mubr.bf16.mxu0 0
        %710 = vmatmul.mubr.bf16.gmra.mrb[0].mxu0 %v652
        %v711 = vpop.f32.mrb[0].mxu0
        %v712 = vadd.f32 %v607, %v711
        %v713 = vpop.f32.mrb[0].mxu0
        %v714 = vadd.f32 %v607, %v713
        %v715 = vpop.f32.mrb[0].mxu0
        %v716 = vadd.f32 %v612, %v715
        %v717 = vpop.f32.mrb[0].mxu0
        %v718 = vadd.f32 %v612, %v717
        %719 = vmatprep.mubr.bf16.mxu0 0
        %720 = vmatmul.mubr.bf16.gmra.mrb[0].mxu0 %v655
        %v721 = vpop.f32.mrb[0].mxu0
        %v722 = vadd.f32 %v617, %v721
        %v723 = vpop.f32.mrb[0].mxu0
        %v724 = vadd.f32 %v617, %v723
        %v725 = vpop.f32.mrb[0].mxu0
        %v726 = vadd.f32 %v622, %v725
        %v727 = vpop.f32.mrb[0].mxu0
        %v728 = vadd.f32 %v622, %v727
        %729 = vdwg.mxu0
        %730 = vmatprep.subr.bf16.mxu0 %v571
        %731 = vmatpush1.bf16.msra.mxu0 %v570
        %732 = vmatprep.subr.bf16.mxu0 %v575
        %733 = vmatpush1.bf16.msra.mxu0 %v574
        %734 = vmatprep.subr.bf16.mxu0 0
        %735 = vmatpush1.bf16.msra.mxu0 0
        %736 = vmatprep.subr.bf16.mxu0 0
        %737 = vmatpush1.bf16.msra.mxu0 0
        %738 = vmatprep.subr.bf16.mxu0 0
        %739 = vmatpush1.bf16.msra.mxu0 0
        %740 = vmatprep.subr.bf16.mxu0 0
        %741 = vmatpush1.bf16.msra.mxu0 0
        %742 = vmatprep.subr.bf16.mxu0 0
        %743 = vmatpush1.bf16.msra.mxu0 0
        %744 = vmatprep.subr.bf16.mxu0 0
        %745 = vmatpush1.bf16.msra.mxu0 0
        %746 = vmatprep.subr.bf16.mxu0 0
        %747 = vmatpush1.bf16.msra.mxu0 0
        %748 = vmatprep.subr.bf16.mxu0 0
        %749 = vmatpush1.bf16.msra.mxu0 0
        %750 = vmatprep.subr.bf16.mxu0 0
        %751 = vmatpush1.bf16.msra.mxu0 0
        %752 = vmatprep.subr.bf16.mxu0 0
        %753 = vmatpush1.bf16.msra.mxu0 0
        %754 = vmatprep.subr.bf16.mxu0 0
        %755 = vmatpush1.bf16.msra.mxu0 0
        %756 = vmatprep.subr.bf16.mxu0 0
        %757 = vmatpush1.bf16.msra.mxu0 0
        %758 = vmatprep.subr.bf16.mxu0 0
        %759 = vmatpush1.bf16.msra.mxu0 0
        %760 = vmatprep.subr.bf16.mxu0 0
        %761 = vmatpush1.bf16.msra.mxu0 0
        %762 = vmatprep.mubr.bf16.mxu0 0
        %763 = vmatmul.mubr.bf16.gmra.mrb[0].mxu0 %v646
        %v764 = vpop.f32.mrb[0].mxu0
        %v765 = vadd.f32 %v587, %v764
        %v766 = vpop.f32.mrb[0].mxu0
        %v767 = vadd.f32 %v587, %v766
        %v768 = vpop.f32.mrb[0].mxu0
        %v769 = vadd.f32 %v592, %v768
        %v770 = vpop.f32.mrb[0].mxu0
        %v771 = vadd.f32 %v592, %v770
        %772 = vmatprep.mubr.bf16.mxu0 0
        %773 = vmatmul.mubr.bf16.gmra.mrb[0].mxu0 %v649
        %v774 = vpop.f32.mrb[0].mxu0
        %v775 = vadd.f32 %v597, %v774
        %v776 = vpop.f32.mrb[0].mxu0
        %v777 = vadd.f32 %v597, %v776
        %v778 = vpop.f32.mrb[0].mxu0
        %v779 = vadd.f32 %v602, %v778
        %v780 = vpop.f32.mrb[0].mxu0
        %v781 = vadd.f32 %v602, %v780
        %782 = vmatprep.mubr.bf16.mxu0 0
        %783 = vmatmul.mubr.bf16.gmra.mrb[0].mxu0 %v652
        %v784 = vpop.f32.mrb[0].mxu0
        %v785 = vadd.f32 %v607, %v784
        %v786 = vpop.f32.mrb[0].mxu0
        %v787 = vadd.f32 %v607, %v786
        %v788 = vpop.f32.mrb[0].mxu0
        %v789 = vadd.f32 %v612, %v788
        %v790 = vpop.f32.mrb[0].mxu0
        %v791 = vadd.f32 %v612, %v790
        %792 = vmatprep.mubr.bf16.mxu0 0
        %793 = vmatmul.mubr.bf16.gmra.mrb[0].mxu0 %v655
        %v794 = vpop.f32.mrb[0].mxu0
        %v795 = vadd.f32 %v617, %v794
        %v796 = vpop.f32.mrb[0].mxu0
        %v797 = vadd.f32 %v617, %v796
        %v798 = vpop.f32.mrb[0].mxu0
        %v799 = vadd.f32 %v622, %v798
        %v800 = vpop.f32.mrb[0].mxu0
        %v801 = vadd.f32 %v622, %v800
        %802 = vdwg.mxu0
        %v803 = vmax.f32 %v692, 0.0
        %v804 = vmax.f32 %v694, 0.0
        %v805 = vmax.f32 %v765, 0.0
        %v806 = vmax.f32 %v767, 0.0
        %v807 = vmax.f32 %v696, 0.0
        %v808 = vmax.f32 %v698, 0.0
        %v809 = vmax.f32 %v769, 0.0
        %v810 = vmax.f32 %v771, 0.0
        %v811 = vmax.f32 %v702, 0.0
        %v812 = vmax.f32 %v704, 0.0
        %v813 = vmax.f32 %v775, 0.0
        %v814 = vmax.f32 %v777, 0.0
        %v815 = vmax.f32 %v706, 0.0
        %v816 = vmax.f32 %v708, 0.0
        %v817 = vmax.f32 %v779, 0.0
        %v818 = vmax.f32 %v781, 0.0
        %v819 = vmax.f32 %v712, 0.0
        %v820 = vmax.f32 %v714, 0.0
        %v821 = vmax.f32 %v785, 0.0
        %v822 = vmax.f32 %v787, 0.0
        %v823 = vmax.f32 %v716, 0.0
        %v824 = vmax.f32 %v718, 0.0
        %v825 = vmax.f32 %v789, 0.0
        %v826 = vmax.f32 %v791, 0.0
        %v827 = vmax.f32 %v722, 0.0
        %v828 = vmax.f32 %v724, 0.0
        %v829 = vmax.f32 %v795, 0.0
        %v830 = vmax.f32 %v797, 0.0
        %v831 = vmax.f32 %v726, 0.0
        %v832 = vmax.f32 %v728, 0.0
        %v833 = vmax.f32 %v799, 0.0
        %v834 = vmax.f32 %v801, 0.0
        %v835 = vld [vmem:[%s5] sm:$0xf]
        %v836 = vld [vmem:[%s5 + $0x4] sm:$0xf]
        %v837 = vld [vmem:[%s5 + $0x8] sm:$0xf]
        %v838 = vld [vmem:[%s5 + $0xc] sm:$0xf]
        %v839 = vld [vmem:[%s5 + $0x10] sm:$0xf]
        %v840 = vld [vmem:[%s5 + $0x14] sm:$0xf]
        %v841 = vld [vmem:[%s5 + $0x18] sm:$0xf]
        %v842 = vld [vmem:[%s5 + $0x1c] sm:$0xf]
        %v843 = vld [vmem:[%s5 + $0x20] sm:$0xf]
        %v844 = vld [vmem:[%s5 + $0x24] sm:$0xf]
        %v845 = vld [vmem:[%s5 + $0x28] sm:$0xf]
        %v846 = vld [vmem:[%s5 + $0x2c] sm:$0xf]
        %v847 = vld [vmem:[%s5 + $0x30] sm:$0xf]
        %v848 = vld [vmem:[%s5 + $0x34] sm:$0xf]
        %v849 = vld [vmem:[%s5 + $0x38] sm:$0xf]
        %v850 = vld [vmem:[%s5 + $0x3c] sm:$0xf]
        %v851 = vpack.c.bf16 %v807, %v803
        %v852 = vpack.c.bf16 %v808, %v804
        %v853 = vpack.c.bf16 %v809, %v805
        %v854 = vpack.c.bf16 %v810, %v806
        %v855 = vpack.c.bf16 %v815, %v811
        %v856 = vpack.c.bf16 %v816, %v812
        %v857 = vpack.c.bf16 %v817, %v813
        %v858 = vpack.c.bf16 %v818, %v814
        %v859 = vpack.c.bf16 %v823, %v819
        %v860 = vpack.c.bf16 %v824, %v820
        %v861 = vpack.c.bf16 %v825, %v821
        %v862 = vpack.c.bf16 %v826, %v822
        %v863 = vpack.c.bf16 %v831, %v827
        %v864 = vpack.c.bf16 %v832, %v828
        %v865 = vpack.c.bf16 %v833, %v829
        %v866 = vpack.c.bf16 %v834, %v830
        %v867 = vld [vmem:[%s6] sm:$0xff]
        %v868 = vld [vmem:[%s6 + $0x8] sm:$0xff]
        %v869 = vld [vmem:[%s6 + $0x10] sm:$0xff]
        %v870 = vld [vmem:[%s6 + $0x18] sm:$0xff]
        %v871 = vld [vmem:[%s6 + $0x20] sm:$0xff]
        %v872 = vld [vmem:[%s6 + $0x28] sm:$0xff]
        %v873 = vld [vmem:[%s6 + $0x30] sm:$0xff]
        %v874 = vld [vmem:[%s6 + $0x38] sm:$0xff]
        %v875 = vld [vmem:[%s6 + $0x40] sm:$0xff]
        %v876 = vld [vmem:[%s6 + $0x48] sm:$0xff]
        %v877 = vld [vmem:[%s6 + $0x50] sm:$0xff]
        %v878 = vld [vmem:[%s6 + $0x58] sm:$0xff]
        %v879 = vld [vmem:[%s6 + $0x60] sm:$0xff]
        %v880 = vld [vmem:[%s6 + $0x68] sm:$0xff]
        %v881 = vld [vmem:[%s6 + $0x70] sm:$0xff]
        %v882 = vld [vmem:[%s6 + $0x78] sm:$0xff]
        %884 = vset.pattern.permute.xlu0 0
        %885 = vperm.xlu0 %884, %v867
        %v886 = vpop.permute.xlu0 %885
        %889 = vset.pattern.permute.xlu0 0
        %890 = vperm.xlu0 %889, %v868
        %v891 = vpop.permute.xlu0 %890
        %894 = vset.pattern.permute.xlu0 0
        %895 = vperm.xlu0 %894, %v869
        %v896 = vpop.permute.xlu0 %895
        %899 = vset.pattern.permute.xlu0 0
        %900 = vperm.xlu0 %899, %v870
        %v901 = vpop.permute.xlu0 %900
        %904 = vset.pattern.permute.xlu0 0
        %905 = vperm.xlu0 %904, %v871
        %v906 = vpop.permute.xlu0 %905
        %909 = vset.pattern.permute.xlu0 0
        %910 = vperm.xlu0 %909, %v872
        %v911 = vpop.permute.xlu0 %910
        %914 = vset.pattern.permute.xlu0 0
        %915 = vperm.xlu0 %914, %v873
        %v916 = vpop.permute.xlu0 %915
        %919 = vset.pattern.permute.xlu0 0
        %920 = vperm.xlu0 %919, %v874
        %v921 = vpop.permute.xlu0 %920
        %924 = vset.pattern.permute.xlu0 0
        %925 = vperm.xlu0 %924, %v875
        %v926 = vpop.permute.xlu0 %925
        %929 = vset.pattern.permute.xlu0 0
        %930 = vperm.xlu0 %929, %v876
        %v931 = vpop.permute.xlu0 %930
        %934 = vset.pattern.permute.xlu0 0
        %935 = vperm.xlu0 %934, %v877
        %v936 = vpop.permute.xlu0 %935
        %939 = vset.pattern.permute.xlu0 0
        %940 = vperm.xlu0 %939, %v878
        %v941 = vpop.permute.xlu0 %940
        %944 = vset.pattern.permute.xlu0 0
        %945 = vperm.xlu0 %944, %v879
        %v946 = vpop.permute.xlu0 %945
        %949 = vset.pattern.permute.xlu0 0
        %950 = vperm.xlu0 %949, %v880
        %v951 = vpop.permute.xlu0 %950
        %954 = vset.pattern.permute.xlu0 0
        %955 = vperm.xlu0 %954, %v881
        %v956 = vpop.permute.xlu0 %955
        %959 = vset.pattern.permute.xlu0 0
        %960 = vperm.xlu0 %959, %v882
        %v961 = vpop.permute.xlu0 %960
        %v979 = vunpack.c.l.b16 %v835
        %v980 = vunpack.c.l.b16 %v836
        %v981 = vunpack.c.l.b16 %v837
        %v982 = vunpack.c.l.b16 %v838
        %v983 = vunpack.c.l.b16 %v839
        %v984 = vunpack.c.l.b16 %v840
        %v985 = vunpack.c.l.b16 %v841
        %v986 = vunpack.c.l.b16 %v842
        %v987 = vunpack.c.l.b16 %v843
        %v988 = vunpack.c.l.b16 %v844
        %v989 = vunpack.c.l.b16 %v845
        %v990 = vunpack.c.l.b16 %v846
        %v991 = vunpack.c.l.b16 %v847
        %v992 = vunpack.c.l.b16 %v848
        %v993 = vunpack.c.l.b16 %v849
        %v994 = vunpack.c.l.b16 %v850
        %v995 = vpack.c.b16 %v980, %v979
        %v996 = vpack.c.b16 %v982, %v981
        %v997 = vpack.c.b16 %v984, %v983
        %v998 = vpack.c.b16 %v986, %v985
        %v999 = vpack.c.b16 %v988, %v987
        %v1000 = vpack.c.b16 %v990, %v989
        %v1001 = vpack.c.b16 %v992, %v991
        %v1002 = vpack.c.b16 %v994, %v993
        %vm1003 = vcmask 523264
        %v1005 = vsel %vm1003, %v995, 0
        %v1008 = vsel %vm1003, %v996, 0
        %v1011 = vsel %vm1003, %v997, 0
        %v1014 = vsel %vm1003, %v998, 0
        %v1017 = vsel %vm1003, %v999, 0
        %v1020 = vsel %vm1003, %v1000, 0
        %v1023 = vsel %vm1003, %v1001, 0
        %v1026 = vsel %vm1003, %v1002, 0
        %1028 = vmatprep.subr.bf16.mxu0 %v852
        %1029 = vmatpush1.bf16.msra.mxu0 %v851
        %1030 = vmatprep.subr.bf16.mxu0 %v856
        %1031 = vmatpush1.bf16.msra.mxu0 %v855
        %1032 = vmatprep.subr.bf16.mxu0 %v860
        %1033 = vmatpush1.bf16.msra.mxu0 %v859
        %1034 = vmatprep.subr.bf16.mxu0 %v864
        %1035 = vmatpush1.bf16.msra.mxu0 %v863
        %1036 = vmatprep.subr.bf16.mxu0 0
        %1037 = vmatpush1.bf16.msra.mxu0 0
        %1038 = vmatprep.subr.bf16.mxu0 0
        %1039 = vmatpush1.bf16.msra.mxu0 0
        %1040 = vmatprep.subr.bf16.mxu0 0
        %1041 = vmatpush1.bf16.msra.mxu0 0
        %1042 = vmatprep.subr.bf16.mxu0 0
        %1043 = vmatpush1.bf16.msra.mxu0 0
        %1044 = vmatprep.subr.bf16.mxu0 0
        %1045 = vmatpush1.bf16.msra.mxu0 0
        %1046 = vmatprep.subr.bf16.mxu0 0
        %1047 = vmatpush1.bf16.msra.mxu0 0
        %1048 = vmatprep.subr.bf16.mxu0 0
        %1049 = vmatpush1.bf16.msra.mxu0 0
        %1050 = vmatprep.subr.bf16.mxu0 0
        %1051 = vmatpush1.bf16.msra.mxu0 0
        %1052 = vmatprep.subr.bf16.mxu0 0
        %1053 = vmatpush1.bf16.msra.mxu0 0
        %1054 = vmatprep.subr.bf16.mxu0 0
        %1055 = vmatpush1.bf16.msra.mxu0 0
        %1056 = vmatprep.subr.bf16.mxu0 0
        %1057 = vmatpush1.bf16.msra.mxu0 0
        %1058 = vmatprep.subr.bf16.mxu0 0
        %1059 = vmatpush1.bf16.msra.mxu0 0
        %1060 = vmatprep.mubr.bf16.mxu0 0
        %1061 = vmatmul.mubr.bf16.gmra.mrb[0].mxu0 %v1005
        %v1062 = vpop.f32.mrb[0].mxu0
        %v1063 = vadd.f32 %v886, %v1062
        %v1064 = vpop.f32.mrb[0].mxu0
        %v1065 = vadd.f32 %v886, %v1064
        %v1066 = vpop.f32.mrb[0].mxu0
        %v1067 = vadd.f32 %v891, %v1066
        %v1068 = vpop.f32.mrb[0].mxu0
        %v1069 = vadd.f32 %v891, %v1068
        %1070 = vmatprep.mubr.bf16.mxu0 0
        %1071 = vmatmul.mubr.bf16.gmra.mrb[0].mxu0 %v1008
        %v1072 = vpop.f32.mrb[0].mxu0
        %v1073 = vadd.f32 %v896, %v1072
        %v1074 = vpop.f32.mrb[0].mxu0
        %v1075 = vadd.f32 %v896, %v1074
        %v1076 = vpop.f32.mrb[0].mxu0
        %v1077 = vadd.f32 %v901, %v1076
        %v1078 = vpop.f32.mrb[0].mxu0
        %v1079 = vadd.f32 %v901, %v1078
        %1080 = vmatprep.mubr.bf16.mxu0 0
        %1081 = vmatmul.mubr.bf16.gmra.mrb[0].mxu0 %v1011
        %v1082 = vpop.f32.mrb[0].mxu0
        %v1083 = vadd.f32 %v906, %v1082
        %v1084 = vpop.f32.mrb[0].mxu0
        %v1085 = vadd.f32 %v906, %v1084
        %v1086 = vpop.f32.mrb[0].mxu0
        %v1087 = vadd.f32 %v911, %v1086
        %v1088 = vpop.f32.mrb[0].mxu0
        %v1089 = vadd.f32 %v911, %v1088
        %1090 = vmatprep.mubr.bf16.mxu0 0
        %1091 = vmatmul.mubr.bf16.gmra.mrb[0].mxu0 %v1014
        %v1092 = vpop.f32.mrb[0].mxu0
        %v1093 = vadd.f32 %v916, %v1092
        %v1094 = vpop.f32.mrb[0].mxu0
        %v1095 = vadd.f32 %v916, %v1094
        %v1096 = vpop.f32.mrb[0].mxu0
        %v1097 = vadd.f32 %v921, %v1096
        %v1098 = vpop.f32.mrb[0].mxu0
        %v1099 = vadd.f32 %v921, %v1098
        %1100 = vmatprep.mubr.bf16.mxu0 0
        %1101 = vmatmul.mubr.bf16.gmra.mrb[0].mxu0 %v1017
        %v1102 = vpop.f32.mrb[0].mxu0
        %v1103 = vadd.f32 %v926, %v1102
        %v1104 = vpop.f32.mrb[0].mxu0
        %v1105 = vadd.f32 %v926, %v1104
        %v1106 = vpop.f32.mrb[0].mxu0
        %v1107 = vadd.f32 %v931, %v1106
        %v1108 = vpop.f32.mrb[0].mxu0
        %v1109 = vadd.f32 %v931, %v1108
        %1110 = vmatprep.mubr.bf16.mxu0 0
        %1111 = vmatmul.mubr.bf16.gmra.mrb[0].mxu0 %v1020
        %v1112 = vpop.f32.mrb[0].mxu0
        %v1113 = vadd.f32 %v936, %v1112
        %v1114 = vpop.f32.mrb[0].mxu0
        %v1115 = vadd.f32 %v936, %v1114
        %v1116 = vpop.f32.mrb[0].mxu0
        %v1117 = vadd.f32 %v941, %v1116
        %v1118 = vpop.f32.mrb[0].mxu0
        %v1119 = vadd.f32 %v941, %v1118
        %1120 = vmatprep.mubr.bf16.mxu0 0
        %1121 = vmatmul.mubr.bf16.gmra.mrb[0].mxu0 %v1023
        %v1122 = vpop.f32.mrb[0].mxu0
        %v1123 = vadd.f32 %v946, %v1122
        %v1124 = vpop.f32.mrb[0].mxu0
        %v1125 = vadd.f32 %v946, %v1124
        %v1126 = vpop.f32.mrb[0].mxu0
        %v1127 = vadd.f32 %v951, %v1126
        %v1128 = vpop.f32.mrb[0].mxu0
        %v1129 = vadd.f32 %v951, %v1128
        %1130 = vmatprep.mubr.bf16.mxu0 0
        %1131 = vmatmul.mubr.bf16.gmra.mrb[0].mxu0 %v1026
        %v1132 = vpop.f32.mrb[0].mxu0
        %v1133 = vadd.f32 %v956, %v1132
        %v1134 = vpop.f32.mrb[0].mxu0
        %v1135 = vadd.f32 %v956, %v1134
        %v1136 = vpop.f32.mrb[0].mxu0
        %v1137 = vadd.f32 %v961, %v1136
        %v1138 = vpop.f32.mrb[0].mxu0
        %v1139 = vadd.f32 %v961, %v1138
        %1140 = vdwg.mxu0
        %1141 = vmatprep.subr.bf16.mxu0 %v854
        %1142 = vmatpush1.bf16.msra.mxu0 %v853
        %1143 = vmatprep.subr.bf16.mxu0 %v858
        %1144 = vmatpush1.bf16.msra.mxu0 %v857
        %1145 = vmatprep.subr.bf16.mxu0 %v862
        %1146 = vmatpush1.bf16.msra.mxu0 %v861
        %1147 = vmatprep.subr.bf16.mxu0 %v866
        %1148 = vmatpush1.bf16.msra.mxu0 %v865
        %1149 = vmatprep.subr.bf16.mxu0 0
        %1150 = vmatpush1.bf16.msra.mxu0 0
        %1151 = vmatprep.subr.bf16.mxu0 0
        %1152 = vmatpush1.bf16.msra.mxu0 0
        %1153 = vmatprep.subr.bf16.mxu0 0
        %1154 = vmatpush1.bf16.msra.mxu0 0
        %1155 = vmatprep.subr.bf16.mxu0 0
        %1156 = vmatpush1.bf16.msra.mxu0 0
        %1157 = vmatprep.subr.bf16.mxu0 0
        %1158 = vmatpush1.bf16.msra.mxu0 0
        %1159 = vmatprep.subr.bf16.mxu0 0
        %1160 = vmatpush1.bf16.msra.mxu0 0
        %1161 = vmatprep.subr.bf16.mxu0 0
        %1162 = vmatpush1.bf16.msra.mxu0 0
        %1163 = vmatprep.subr.bf16.mxu0 0
        %1164 = vmatpush1.bf16.msra.mxu0 0
        %1165 = vmatprep.subr.bf16.mxu0 0
        %1166 = vmatpush1.bf16.msra.mxu0 0
        %1167 = vmatprep.subr.bf16.mxu0 0
        %1168 = vmatpush1.bf16.msra.mxu0 0
        %1169 = vmatprep.subr.bf16.mxu0 0
        %1170 = vmatpush1.bf16.msra.mxu0 0
        %1171 = vmatprep.subr.bf16.mxu0 0
        %1172 = vmatpush1.bf16.msra.mxu0 0
        %1173 = vmatprep.mubr.bf16.mxu0 0
        %1174 = vmatmul.mubr.bf16.gmra.mrb[0].mxu0 %v1005
        %v1175 = vpop.f32.mrb[0].mxu0
        %v1176 = vadd.f32 %v886, %v1175
        %v1177 = vpop.f32.mrb[0].mxu0
        %v1178 = vadd.f32 %v886, %v1177
        %v1179 = vpop.f32.mrb[0].mxu0
        %v1180 = vadd.f32 %v891, %v1179
        %v1181 = vpop.f32.mrb[0].mxu0
        %v1182 = vadd.f32 %v891, %v1181
        %1183 = vmatprep.mubr.bf16.mxu0 0
        %1184 = vmatmul.mubr.bf16.gmra.mrb[0].mxu0 %v1008
        %v1185 = vpop.f32.mrb[0].mxu0
        %v1186 = vadd.f32 %v896, %v1185
        %v1187 = vpop.f32.mrb[0].mxu0
        %v1188 = vadd.f32 %v896, %v1187
        %v1189 = vpop.f32.mrb[0].mxu0
        %v1190 = vadd.f32 %v901, %v1189
        %v1191 = vpop.f32.mrb[0].mxu0
        %v1192 = vadd.f32 %v901, %v1191
        %1193 = vmatprep.mubr.bf16.mxu0 0
        %1194 = vmatmul.mubr.bf16.gmra.mrb[0].mxu0 %v1011
        %v1195 = vpop.f32.mrb[0].mxu0
        %v1196 = vadd.f32 %v906, %v1195
        %v1197 = vpop.f32.mrb[0].mxu0
        %v1198 = vadd.f32 %v906, %v1197
        %v1199 = vpop.f32.mrb[0].mxu0
        %v1200 = vadd.f32 %v911, %v1199
        %v1201 = vpop.f32.mrb[0].mxu0
        %v1202 = vadd.f32 %v911, %v1201
        %1203 = vmatprep.mubr.bf16.mxu0 0
        %1204 = vmatmul.mubr.bf16.gmra.mrb[0].mxu0 %v1014
        %v1205 = vpop.f32.mrb[0].mxu0
        %v1206 = vadd.f32 %v916, %v1205
        %v1207 = vpop.f32.mrb[0].mxu0
        %v1208 = vadd.f32 %v916, %v1207
        %v1209 = vpop.f32.mrb[0].mxu0
        %v1210 = vadd.f32 %v921, %v1209
        %v1211 = vpop.f32.mrb[0].mxu0
        %v1212 = vadd.f32 %v921, %v1211
        %1213 = vmatprep.mubr.bf16.mxu0 0
        %1214 = vmatmul.mubr.bf16.gmra.mrb[0].mxu0 %v1017
        %v1215 = vpop.f32.mrb[0].mxu0
        %v1216 = vadd.f32 %v926, %v1215
        %v1217 = vpop.f32.mrb[0].mxu0
        %v1218 = vadd.f32 %v926, %v1217
        %v1219 = vpop.f32.mrb[0].mxu0
        %v1220 = vadd.f32 %v931, %v1219
        %v1221 = vpop.f32.mrb[0].mxu0
        %v1222 = vadd.f32 %v931, %v1221
        %1223 = vmatprep.mubr.bf16.mxu0 0
        %1224 = vmatmul.mubr.bf16.gmra.mrb[0].mxu0 %v1020
        %v1225 = vpop.f32.mrb[0].mxu0
        %v1226 = vadd.f32 %v936, %v1225
        %v1227 = vpop.f32.mrb[0].mxu0
        %v1228 = vadd.f32 %v936, %v1227
        %v1229 = vpop.f32.mrb[0].mxu0
        %v1230 = vadd.f32 %v941, %v1229
        %v1231 = vpop.f32.mrb[0].mxu0
        %v1232 = vadd.f32 %v941, %v1231
        %1233 = vmatprep.mubr.bf16.mxu0 0
        %1234 = vmatmul.mubr.bf16.gmra.mrb[0].mxu0 %v1023
        %v1235 = vpop.f32.mrb[0].mxu0
        %v1236 = vadd.f32 %v946, %v1235
        %v1237 = vpop.f32.mrb[0].mxu0
        %v1238 = vadd.f32 %v946, %v1237
        %v1239 = vpop.f32.mrb[0].mxu0
        %v1240 = vadd.f32 %v951, %v1239
        %v1241 = vpop.f32.mrb[0].mxu0
        %v1242 = vadd.f32 %v951, %v1241
        %1243 = vmatprep.mubr.bf16.mxu0 0
        %1244 = vmatmul.mubr.bf16.gmra.mrb[0].mxu0 %v1026
        %v1245 = vpop.f32.mrb[0].mxu0
        %v1246 = vadd.f32 %v956, %v1245
        %v1247 = vpop.f32.mrb[0].mxu0
        %v1248 = vadd.f32 %v956, %v1247
        %v1249 = vpop.f32.mrb[0].mxu0
        %v1250 = vadd.f32 %v961, %v1249
        %v1251 = vpop.f32.mrb[0].mxu0
        %v1252 = vadd.f32 %v961, %v1251
        %1253 = vdwg.mxu0
        %v1254 = vmax.f32 %v1063, 0.0
        %v1255 = vmax.f32 %v1065, 0.0
        %v1256 = vmax.f32 %v1176, 0.0
        %v1257 = vmax.f32 %v1178, 0.0
        %v1258 = vmax.f32 %v1067, 0.0
        %v1259 = vmax.f32 %v1069, 0.0
        %v1260 = vmax.f32 %v1180, 0.0
        %v1261 = vmax.f32 %v1182, 0.0
        %v1262 = vmax.f32 %v1073, 0.0
        %v1263 = vmax.f32 %v1075, 0.0
        %v1264 = vmax.f32 %v1186, 0.0
        %v1265 = vmax.f32 %v1188, 0.0
        %v1266 = vmax.f32 %v1077, 0.0
        %v1267 = vmax.f32 %v1079, 0.0
        %v1268 = vmax.f32 %v1190, 0.0
        %v1269 = vmax.f32 %v1192, 0.0
        %v1270 = vmax.f32 %v1083, 0.0
        %v1271 = vmax.f32 %v1085, 0.0
        %v1272 = vmax.f32 %v1196, 0.0
        %v1273 = vmax.f32 %v1198, 0.0
        %v1274 = vmax.f32 %v1087, 0.0
        %v1275 = vmax.f32 %v1089, 0.0
        %v1276 = vmax.f32 %v1200, 0.0
        %v1277 = vmax.f32 %v1202, 0.0
        %v1278 = vmax.f32 %v1093, 0.0
        %v1279 = vmax.f32 %v1095, 0.0
        %v1280 = vmax.f32 %v1206, 0.0
        %v1281 = vmax.f32 %v1208, 0.0
        %v1282 = vmax.f32 %v1097, 0.0
        %v1283 = vmax.f32 %v1099, 0.0
        %v1284 = vmax.f32 %v1210, 0.0
        %v1285 = vmax.f32 %v1212, 0.0
        %v1286 = vmax.f32 %v1103, 0.0
        %v1287 = vmax.f32 %v1105, 0.0
        %v1288 = vmax.f32 %v1216, 0.0
        %v1289 = vmax.f32 %v1218, 0.0
        %v1290 = vmax.f32 %v1107, 0.0
        %v1291 = vmax.f32 %v1109, 0.0
        %v1292 = vmax.f32 %v1220, 0.0
        %v1293 = vmax.f32 %v1222, 0.0
        %v1294 = vmax.f32 %v1113, 0.0
        %v1295 = vmax.f32 %v1115, 0.0
        %v1296 = vmax.f32 %v1226, 0.0
        %v1297 = vmax.f32 %v1228, 0.0
        %v1298 = vmax.f32 %v1117, 0.0
        %v1299 = vmax.f32 %v1119, 0.0
        %v1300 = vmax.f32 %v1230, 0.0
        %v1301 = vmax.f32 %v1232, 0.0
        %v1302 = vmax.f32 %v1123, 0.0
        %v1303 = vmax.f32 %v1125, 0.0
        %v1304 = vmax.f32 %v1236, 0.0
        %v1305 = vmax.f32 %v1238, 0.0
        %v1306 = vmax.f32 %v1127, 0.0
        %v1307 = vmax.f32 %v1129, 0.0
        %v1308 = vmax.f32 %v1240, 0.0
        %v1309 = vmax.f32 %v1242, 0.0
        %v1310 = vmax.f32 %v1133, 0.0
        %v1311 = vmax.f32 %v1135, 0.0
        %v1312 = vmax.f32 %v1246, 0.0
        %v1313 = vmax.f32 %v1248, 0.0
        %v1314 = vmax.f32 %v1137, 0.0
        %v1315 = vmax.f32 %v1139, 0.0
        %v1316 = vmax.f32 %v1250, 0.0
        %v1317 = vmax.f32 %v1252, 0.0
        %p1318 = scmp.eq.s32.totalorder %s29, 0
        // Predicated region
        $region57: #{tpu_custom_call.1} parent=55 // pred_check
          %p1319 = pneg %p1318
        $region58: #{tpu_custom_call.1} parent=55 // pred_check_branch
          %1321 = sbr.rel (%p1319) target = $region60
        $region59: #{tpu_custom_call.1} parent=55 // pred_region
          %1322 = vst [vmem:[#allocation2] sm:$0xff] %v1254
          %1323 = vst [vmem:[#allocation2 + $0x8] sm:$0xff] %v1255
          %1324 = vst [vmem:[#allocation2 + $0x10] sm:$0xff] %v1256
          %1325 = vst [vmem:[#allocation2 + $0x18] sm:$0xff] %v1257
          %1326 = vst [vmem:[#allocation2 + $0x20] sm:$0xff] %v1258
          %1327 = vst [vmem:[#allocation2 + $0x28] sm:$0xff] %v1259
          %1328 = vst [vmem:[#allocation2 + $0x30] sm:$0xff] %v1260
          %1329 = vst [vmem:[#allocation2 + $0x38] sm:$0xff] %v1261
          %1330 = vst [vmem:[#allocation2 + $0x40] sm:$0xff] %v1262
          %1331 = vst [vmem:[#allocation2 + $0x48] sm:$0xff] %v1263
          %1332 = vst [vmem:[#allocation2 + $0x50] sm:$0xff] %v1264
          %1333 = vst [vmem:[#allocation2 + $0x58] sm:$0xff] %v1265
          %1334 = vst [vmem:[#allocation2 + $0x60] sm:$0xff] %v1266
          %1335 = vst [vmem:[#allocation2 + $0x68] sm:$0xff] %v1267
          %1336 = vst [vmem:[#allocation2 + $0x70] sm:$0xff] %v1268
          %1337 = vst [vmem:[#allocation2 + $0x78] sm:$0xff] %v1269
          %1338 = vst [vmem:[#allocation2 + $0x80] sm:$0xff] %v1270
          %1339 = vst [vmem:[#allocation2 + $0x88] sm:$0xff] %v1271
          %1340 = vst [vmem:[#allocation2 + $0x90] sm:$0xff] %v1272
          %1341 = vst [vmem:[#allocation2 + $0x98] sm:$0xff] %v1273
          %1342 = vst [vmem:[#allocation2 + $0xa0] sm:$0xff] %v1274
          %1343 = vst [vmem:[#allocation2 + $0xa8] sm:$0xff] %v1275
          %1344 = vst [vmem:[#allocation2 + $0xb0] sm:$0xff] %v1276
          %1345 = vst [vmem:[#allocation2 + $0xb8] sm:$0xff] %v1277
          %1346 = vst [vmem:[#allocation2 + $0xc0] sm:$0xff] %v1278
          %1347 = vst [vmem:[#allocation2 + $0xc8] sm:$0xff] %v1279
          %1348 = vst [vmem:[#allocation2 + $0xd0] sm:$0xff] %v1280
          %1349 = vst [vmem:[#allocation2 + $0xd8] sm:$0xff] %v1281
          %1350 = vst [vmem:[#allocation2 + $0xe0] sm:$0xff] %v1282
          %1351 = vst [vmem:[#allocation2 + $0xe8] sm:$0xff] %v1283
          %1352 = vst [vmem:[#allocation2 + $0xf0] sm:$0xff] %v1284
          %1353 = vst [vmem:[#allocation2 + $0xf8] sm:$0xff] %v1285
          %1354 = vst [vmem:[#allocation2 + $0x100] sm:$0xff] %v1286
          %1355 = vst [vmem:[#allocation2 + $0x108] sm:$0xff] %v1287
          %1356 = vst [vmem:[#allocation2 + $0x110] sm:$0xff] %v1288
          %1357 = vst [vmem:[#allocation2 + $0x118] sm:$0xff] %v1289
          %1358 = vst [vmem:[#allocation2 + $0x120] sm:$0xff] %v1290
          %1359 = vst [vmem:[#allocation2 + $0x128] sm:$0xff] %v1291
          %1360 = vst [vmem:[#allocation2 + $0x130] sm:$0xff] %v1292
          %1361 = vst [vmem:[#allocation2 + $0x138] sm:$0xff] %v1293
          %1362 = vst [vmem:[#allocation2 + $0x140] sm:$0xff] %v1294
          %1363 = vst [vmem:[#allocation2 + $0x148] sm:$0xff] %v1295
          %1364 = vst [vmem:[#allocation2 + $0x150] sm:$0xff] %v1296
          %1365 = vst [vmem:[#allocation2 + $0x158] sm:$0xff] %v1297
          %1366 = vst [vmem:[#allocation2 + $0x160] sm:$0xff] %v1298
          %1367 = vst [vmem:[#allocation2 + $0x168] sm:$0xff] %v1299
          %1368 = vst [vmem:[#allocation2 + $0x170] sm:$0xff] %v1300
          %1369 = vst [vmem:[#allocation2 + $0x178] sm:$0xff] %v1301
          %1370 = vst [vmem:[#allocation2 + $0x180] sm:$0xff] %v1302
          %1371 = vst [vmem:[#allocation2 + $0x188] sm:$0xff] %v1303
          %1372 = vst [vmem:[#allocation2 + $0x190] sm:$0xff] %v1304
          %1373 = vst [vmem:[#allocation2 + $0x198] sm:$0xff] %v1305
          %1374 = vst [vmem:[#allocation2 + $0x1a0] sm:$0xff] %v1306
          %1375 = vst [vmem:[#allocation2 + $0x1a8] sm:$0xff] %v1307
          %1376 = vst [vmem:[#allocation2 + $0x1b0] sm:$0xff] %v1308
          %1377 = vst [vmem:[#allocation2 + $0x1b8] sm:$0xff] %v1309
          %1378 = vst [vmem:[#allocation2 + $0x1c0] sm:$0xff] %v1310
          %1379 = vst [vmem:[#allocation2 + $0x1c8] sm:$0xff] %v1311
          %1380 = vst [vmem:[#allocation2 + $0x1d0] sm:$0xff] %v1312
          %1381 = vst [vmem:[#allocation2 + $0x1d8] sm:$0xff] %v1313
          %1382 = vst [vmem:[#allocation2 + $0x1e0] sm:$0xff] %v1314
          %1383 = vst [vmem:[#allocation2 + $0x1e8] sm:$0xff] %v1315
          %1384 = vst [vmem:[#allocation2 + $0x1f0] sm:$0xff] %v1316
          %1385 = vst [vmem:[#allocation2 + $0x1f8] sm:$0xff] %v1317
        $region60: #{tpu_custom_call.1} parent=55 // pred_fallthru
          _
        %p1386 = scmp.gt.s32.totalorder %s29, 0
        // Predicated region
        $region61: #{tpu_custom_call.1} parent=55 // pred_check
          %p1387 = pneg %p1386
        $region62: #{tpu_custom_call.1} parent=55 // pred_check_branch
          %1389 = sbr.rel (%p1387) target = $region64
        $region63: #{tpu_custom_call.1} parent=55 // pred_region
          %v1390 = vld [vmem:[#allocation2] sm:$0xff]
          %v1391 = vld [vmem:[#allocation2 + $0x8] sm:$0xff]
          %v1392 = vld [vmem:[#allocation2 + $0x10] sm:$0xff]
          %v1393 = vld [vmem:[#allocation2 + $0x18] sm:$0xff]
          %v1394 = vld [vmem:[#allocation2 + $0x20] sm:$0xff]
          %v1395 = vld [vmem:[#allocation2 + $0x28] sm:$0xff]
          %v1396 = vld [vmem:[#allocation2 + $0x30] sm:$0xff]
          %v1397 = vld [vmem:[#allocation2 + $0x38] sm:$0xff]
          %v1398 = vld [vmem:[#allocation2 + $0x40] sm:$0xff]
          %v1399 = vld [vmem:[#allocation2 + $0x48] sm:$0xff]
          %v1400 = vld [vmem:[#allocation2 + $0x50] sm:$0xff]
          %v1401 = vld [vmem:[#allocation2 + $0x58] sm:$0xff]
          %v1402 = vld [vmem:[#allocation2 + $0x60] sm:$0xff]
          %v1403 = vld [vmem:[#allocation2 + $0x68] sm:$0xff]
          %v1404 = vld [vmem:[#allocation2 + $0x70] sm:$0xff]
          %v1405 = vld [vmem:[#allocation2 + $0x78] sm:$0xff]
          %v1406 = vld [vmem:[#allocation2 + $0x80] sm:$0xff]
          %v1407 = vld [vmem:[#allocation2 + $0x88] sm:$0xff]
          %v1408 = vld [vmem:[#allocation2 + $0x90] sm:$0xff]
          %v1409 = vld [vmem:[#allocation2 + $0x98] sm:$0xff]
          %v1410 = vld [vmem:[#allocation2 + $0xa0] sm:$0xff]
          %v1411 = vld [vmem:[#allocation2 + $0xa8] sm:$0xff]
          %v1412 = vld [vmem:[#allocation2 + $0xb0] sm:$0xff]
          %v1413 = vld [vmem:[#allocation2 + $0xb8] sm:$0xff]
          %v1414 = vld [vmem:[#allocation2 + $0xc0] sm:$0xff]
          %v1415 = vld [vmem:[#allocation2 + $0xc8] sm:$0xff]
          %v1416 = vld [vmem:[#allocation2 + $0xd0] sm:$0xff]
          %v1417 = vld [vmem:[#allocation2 + $0xd8] sm:$0xff]
          %v1418 = vld [vmem:[#allocation2 + $0xe0] sm:$0xff]
          %v1419 = vld [vmem:[#allocation2 + $0xe8] sm:$0xff]
          %v1420 = vld [vmem:[#allocation2 + $0xf0] sm:$0xff]
          %v1421 = vld [vmem:[#allocation2 + $0xf8] sm:$0xff]
          %v1422 = vld [vmem:[#allocation2 + $0x100] sm:$0xff]
          %v1423 = vld [vmem:[#allocation2 + $0x108] sm:$0xff]
          %v1424 = vld [vmem:[#allocation2 + $0x110] sm:$0xff]
          %v1425 = vld [vmem:[#allocation2 + $0x118] sm:$0xff]
          %v1426 = vld [vmem:[#allocation2 + $0x120] sm:$0xff]
          %v1427 = vld [vmem:[#allocation2 + $0x128] sm:$0xff]
          %v1428 = vld [vmem:[#allocation2 + $0x130] sm:$0xff]
          %v1429 = vld [vmem:[#allocation2 + $0x138] sm:$0xff]
          %v1430 = vld [vmem:[#allocation2 + $0x140] sm:$0xff]
          %v1431 = vld [vmem:[#allocation2 + $0x148] sm:$0xff]
          %v1432 = vld [vmem:[#allocation2 + $0x150] sm:$0xff]
          %v1433 = vld [vmem:[#allocation2 + $0x158] sm:$0xff]
          %v1434 = vld [vmem:[#allocation2 + $0x160] sm:$0xff]
          %v1435 = vld [vmem:[#allocation2 + $0x168] sm:$0xff]
          %v1436 = vld [vmem:[#allocation2 + $0x170] sm:$0xff]
          %v1437 = vld [vmem:[#allocation2 + $0x178] sm:$0xff]
          %v1438 = vld [vmem:[#allocation2 + $0x180] sm:$0xff]
          %v1439 = vld [vmem:[#allocation2 + $0x188] sm:$0xff]
          %v1440 = vld [vmem:[#allocation2 + $0x190] sm:$0xff]
          %v1441 = vld [vmem:[#allocation2 + $0x198] sm:$0xff]
          %v1442 = vld [vmem:[#allocation2 + $0x1a0] sm:$0xff]
          %v1443 = vld [vmem:[#allocation2 + $0x1a8] sm:$0xff]
          %v1444 = vld [vmem:[#allocation2 + $0x1b0] sm:$0xff]
          %v1445 = vld [vmem:[#allocation2 + $0x1b8] sm:$0xff]
          %v1446 = vld [vmem:[#allocation2 + $0x1c0] sm:$0xff]
          %v1447 = vld [vmem:[#allocation2 + $0x1c8] sm:$0xff]
          %v1448 = vld [vmem:[#allocation2 + $0x1d0] sm:$0xff]
          %v1449 = vld [vmem:[#allocation2 + $0x1d8] sm:$0xff]
          %v1450 = vld [vmem:[#allocation2 + $0x1e0] sm:$0xff]
          %v1451 = vld [vmem:[#allocation2 + $0x1e8] sm:$0xff]
          %v1452 = vld [vmem:[#allocation2 + $0x1f0] sm:$0xff]
          %v1453 = vld [vmem:[#allocation2 + $0x1f8] sm:$0xff]
          %v1454 = vmax.f32 %v1390, %v1254
          %v1455 = vmax.f32 %v1391, %v1255
          %v1456 = vmax.f32 %v1392, %v1256
          %v1457 = vmax.f32 %v1393, %v1257
          %v1458 = vmax.f32 %v1394, %v1258
          %v1459 = vmax.f32 %v1395, %v1259
          %v1460 = vmax.f32 %v1396, %v1260
          %v1461 = vmax.f32 %v1397, %v1261
          %v1462 = vmax.f32 %v1398, %v1262
          %v1463 = vmax.f32 %v1399, %v1263
          %v1464 = vmax.f32 %v1400, %v1264
          %v1465 = vmax.f32 %v1401, %v1265
          %v1466 = vmax.f32 %v1402, %v1266
          %v1467 = vmax.f32 %v1403, %v1267
          %v1468 = vmax.f32 %v1404, %v1268
          %v1469 = vmax.f32 %v1405, %v1269
          %v1470 = vmax.f32 %v1406, %v1270
          %v1471 = vmax.f32 %v1407, %v1271
          %v1472 = vmax.f32 %v1408, %v1272
          %v1473 = vmax.f32 %v1409, %v1273
          %v1474 = vmax.f32 %v1410, %v1274
          %v1475 = vmax.f32 %v1411, %v1275
          %v1476 = vmax.f32 %v1412, %v1276
          %v1477 = vmax.f32 %v1413, %v1277
          %v1478 = vmax.f32 %v1414, %v1278
          %v1479 = vmax.f32 %v1415, %v1279
          %v1480 = vmax.f32 %v1416, %v1280
          %v1481 = vmax.f32 %v1417, %v1281
          %v1482 = vmax.f32 %v1418, %v1282
          %v1483 = vmax.f32 %v1419, %v1283
          %v1484 = vmax.f32 %v1420, %v1284
          %v1485 = vmax.f32 %v1421, %v1285
          %v1486 = vmax.f32 %v1422, %v1286
          %v1487 = vmax.f32 %v1423, %v1287
          %v1488 = vmax.f32 %v1424, %v1288
          %v1489 = vmax.f32 %v1425, %v1289
          %v1490 = vmax.f32 %v1426, %v1290
          %v1491 = vmax.f32 %v1427, %v1291
          %v1492 = vmax.f32 %v1428, %v1292
          %v1493 = vmax.f32 %v1429, %v1293
          %v1494 = vmax.f32 %v1430, %v1294
          %v1495 = vmax.f32 %v1431, %v1295
          %v1496 = vmax.f32 %v1432, %v1296
          %v1497 = vmax.f32 %v1433, %v1297
          %v1498 = vmax.f32 %v1434, %v1298
          %v1499 = vmax.f32 %v1435, %v1299
          %v1500 = vmax.f32 %v1436, %v1300
          %v1501 = vmax.f32 %v1437, %v1301
          %v1502 = vmax.f32 %v1438, %v1302
          %v1503 = vmax.f32 %v1439, %v1303
          %v1504 = vmax.f32 %v1440, %v1304
          %v1505 = vmax.f32 %v1441, %v1305
          %v1506 = vmax.f32 %v1442, %v1306
          %v1507 = vmax.f32 %v1443, %v1307
          %v1508 = vmax.f32 %v1444, %v1308
          %v1509 = vmax.f32 %v1445, %v1309
          %v1510 = vmax.f32 %v1446, %v1310
          %v1511 = vmax.f32 %v1447, %v1311
          %v1512 = vmax.f32 %v1448, %v1312
          %v1513 = vmax.f32 %v1449, %v1313
          %v1514 = vmax.f32 %v1450, %v1314
          %v1515 = vmax.f32 %v1451, %v1315
          %v1516 = vmax.f32 %v1452, %v1316
          %v1517 = vmax.f32 %v1453, %v1317
          %1518 = vst [vmem:[#allocation2] sm:$0xff] %v1454
          %1519 = vst [vmem:[#allocation2 + $0x8] sm:$0xff] %v1455
          %1520 = vst [vmem:[#allocation2 + $0x10] sm:$0xff] %v1456
          %1521 = vst [vmem:[#allocation2 + $0x18] sm:$0xff] %v1457
          %1522 = vst [vmem:[#allocation2 + $0x20] sm:$0xff] %v1458
          %1523 = vst [vmem:[#allocation2 + $0x28] sm:$0xff] %v1459
          %1524 = vst [vmem:[#allocation2 + $0x30] sm:$0xff] %v1460
          %1525 = vst [vmem:[#allocation2 + $0x38] sm:$0xff] %v1461
          %1526 = vst [vmem:[#allocation2 + $0x40] sm:$0xff] %v1462
          %1527 = vst [vmem:[#allocation2 + $0x48] sm:$0xff] %v1463
          %1528 = vst [vmem:[#allocation2 + $0x50] sm:$0xff] %v1464
          %1529 = vst [vmem:[#allocation2 + $0x58] sm:$0xff] %v1465
          %1530 = vst [vmem:[#allocation2 + $0x60] sm:$0xff] %v1466
          %1531 = vst [vmem:[#allocation2 + $0x68] sm:$0xff] %v1467
          %1532 = vst [vmem:[#allocation2 + $0x70] sm:$0xff] %v1468
          %1533 = vst [vmem:[#allocation2 + $0x78] sm:$0xff] %v1469
          %1534 = vst [vmem:[#allocation2 + $0x80] sm:$0xff] %v1470
          %1535 = vst [vmem:[#allocation2 + $0x88] sm:$0xff] %v1471
          %1536 = vst [vmem:[#allocation2 + $0x90] sm:$0xff] %v1472
          %1537 = vst [vmem:[#allocation2 + $0x98] sm:$0xff] %v1473
          %1538 = vst [vmem:[#allocation2 + $0xa0] sm:$0xff] %v1474
          %1539 = vst [vmem:[#allocation2 + $0xa8] sm:$0xff] %v1475
          %1540 = vst [vmem:[#allocation2 + $0xb0] sm:$0xff] %v1476
          %1541 = vst [vmem:[#allocation2 + $0xb8] sm:$0xff] %v1477
          %1542 = vst [vmem:[#allocation2 + $0xc0] sm:$0xff] %v1478
          %1543 = vst [vmem:[#allocation2 + $0xc8] sm:$0xff] %v1479
          %1544 = vst [vmem:[#allocation2 + $0xd0] sm:$0xff] %v1480
          %1545 = vst [vmem:[#allocation2 + $0xd8] sm:$0xff] %v1481
          %1546 = vst [vmem:[#allocation2 + $0xe0] sm:$0xff] %v1482
          %1547 = vst [vmem:[#allocation2 + $0xe8] sm:$0xff] %v1483
          %1548 = vst [vmem:[#allocation2 + $0xf0] sm:$0xff] %v1484
          %1549 = vst [vmem:[#allocation2 + $0xf8] sm:$0xff] %v1485
          %1550 = vst [vmem:[#allocation2 + $0x100] sm:$0xff] %v1486
          %1551 = vst [vmem:[#allocation2 + $0x108] sm:$0xff] %v1487
          %1552 = vst [vmem:[#allocation2 + $0x110] sm:$0xff] %v1488
          %1553 = vst [vmem:[#allocation2 + $0x118] sm:$0xff] %v1489
          %1554 = vst [vmem:[#allocation2 + $0x120] sm:$0xff] %v1490
          %1555 = vst [vmem:[#allocation2 + $0x128] sm:$0xff] %v1491
          %1556 = vst [vmem:[#allocation2 + $0x130] sm:$0xff] %v1492
          %1557 = vst [vmem:[#allocation2 + $0x138] sm:$0xff] %v1493
          %1558 = vst [vmem:[#allocation2 + $0x140] sm:$0xff] %v1494
          %1559 = vst [vmem:[#allocation2 + $0x148] sm:$0xff] %v1495
          %1560 = vst [vmem:[#allocation2 + $0x150] sm:$0xff] %v1496
          %1561 = vst [vmem:[#allocation2 + $0x158] sm:$0xff] %v1497
          %1562 = vst [vmem:[#allocation2 + $0x160] sm:$0xff] %v1498
          %1563 = vst [vmem:[#allocation2 + $0x168] sm:$0xff] %v1499
          %1564 = vst [vmem:[#allocation2 + $0x170] sm:$0xff] %v1500
          %1565 = vst [vmem:[#allocation2 + $0x178] sm:$0xff] %v1501
          %1566 = vst [vmem:[#allocation2 + $0x180] sm:$0xff] %v1502
          %1567 = vst [vmem:[#allocation2 + $0x188] sm:$0xff] %v1503
          %1568 = vst [vmem:[#allocation2 + $0x190] sm:$0xff] %v1504
          %1569 = vst [vmem:[#allocation2 + $0x198] sm:$0xff] %v1505
          %1570 = vst [vmem:[#allocation2 + $0x1a0] sm:$0xff] %v1506
          %1571 = vst [vmem:[#allocation2 + $0x1a8] sm:$0xff] %v1507
          %1572 = vst [vmem:[#allocation2 + $0x1b0] sm:$0xff] %v1508
          %1573 = vst [vmem:[#allocation2 + $0x1b8] sm:$0xff] %v1509
          %1574 = vst [vmem:[#allocation2 + $0x1c0] sm:$0xff] %v1510
          %1575 = vst [vmem:[#allocation2 + $0x1c8] sm:$0xff] %v1511
          %1576 = vst [vmem:[#allocation2 + $0x1d0] sm:$0xff] %v1512
          %1577 = vst [vmem:[#allocation2 + $0x1d8] sm:$0xff] %v1513
          %1578 = vst [vmem:[#allocation2 + $0x1e0] sm:$0xff] %v1514
          %1579 = vst [vmem:[#allocation2 + $0x1e8] sm:$0xff] %v1515
          %1580 = vst [vmem:[#allocation2 + $0x1f0] sm:$0xff] %v1516
          %1581 = vst [vmem:[#allocation2 + $0x1f8] sm:$0xff] %v1517
        $region64: #{tpu_custom_call.1} parent=55 // pred_fallthru
          _
        %p1582 = scmp.eq.s32.totalorder %s29, 1
        // Predicated region
        $region65: #{tpu_custom_call.1} parent=55 // pred_check
          %p1583 = pneg %p1582
        $region66: #{tpu_custom_call.1} parent=55 // pred_check_branch
          %1585 = sbr.rel (%p1583) target = $region68
        $region67: #{tpu_custom_call.1} parent=55 // pred_region
          %v1586 = vld [vmem:[#allocation2] sm:$0xff]
          %v1587 = vld [vmem:[#allocation2 + $0x8] sm:$0xff]
          %v1588 = vld [vmem:[#allocation2 + $0x10] sm:$0xff]
          %v1589 = vld [vmem:[#allocation2 + $0x18] sm:$0xff]
          %v1590 = vld [vmem:[#allocation2 + $0x20] sm:$0xff]
          %v1591 = vld [vmem:[#allocation2 + $0x28] sm:$0xff]
          %v1592 = vld [vmem:[#allocation2 + $0x30] sm:$0xff]
          %v1593 = vld [vmem:[#allocation2 + $0x38] sm:$0xff]
          %v1594 = vld [vmem:[#allocation2 + $0x40] sm:$0xff]
          %v1595 = vld [vmem:[#allocation2 + $0x48] sm:$0xff]
          %v1596 = vld [vmem:[#allocation2 + $0x50] sm:$0xff]
          %v1597 = vld [vmem:[#allocation2 + $0x58] sm:$0xff]
          %v1598 = vld [vmem:[#allocation2 + $0x60] sm:$0xff]
          %v1599 = vld [vmem:[#allocation2 + $0x68] sm:$0xff]
          %v1600 = vld [vmem:[#allocation2 + $0x70] sm:$0xff]
          %v1601 = vld [vmem:[#allocation2 + $0x78] sm:$0xff]
          %v1602 = vld [vmem:[#allocation2 + $0x80] sm:$0xff]
          %v1603 = vld [vmem:[#allocation2 + $0x88] sm:$0xff]
          %v1604 = vld [vmem:[#allocation2 + $0x90] sm:$0xff]
          %v1605 = vld [vmem:[#allocation2 + $0x98] sm:$0xff]
          %v1606 = vld [vmem:[#allocation2 + $0xa0] sm:$0xff]
          %v1607 = vld [vmem:[#allocation2 + $0xa8] sm:$0xff]
          %v1608 = vld [vmem:[#allocation2 + $0xb0] sm:$0xff]
          %v1609 = vld [vmem:[#allocation2 + $0xb8] sm:$0xff]
          %v1610 = vld [vmem:[#allocation2 + $0xc0] sm:$0xff]
          %v1611 = vld [vmem:[#allocation2 + $0xc8] sm:$0xff]
          %v1612 = vld [vmem:[#allocation2 + $0xd0] sm:$0xff]
          %v1613 = vld [vmem:[#allocation2 + $0xd8] sm:$0xff]
          %v1614 = vld [vmem:[#allocation2 + $0xe0] sm:$0xff]
          %v1615 = vld [vmem:[#allocation2 + $0xe8] sm:$0xff]
          %v1616 = vld [vmem:[#allocation2 + $0xf0] sm:$0xff]
          %v1617 = vld [vmem:[#allocation2 + $0xf8] sm:$0xff]
          %v1618 = vld [vmem:[#allocation2 + $0x100] sm:$0xff]
          %v1619 = vld [vmem:[#allocation2 + $0x108] sm:$0xff]
          %v1620 = vld [vmem:[#allocation2 + $0x110] sm:$0xff]
          %v1621 = vld [vmem:[#allocation2 + $0x118] sm:$0xff]
          %v1622 = vld [vmem:[#allocation2 + $0x120] sm:$0xff]
          %v1623 = vld [vmem:[#allocation2 + $0x128] sm:$0xff]
          %v1624 = vld [vmem:[#allocation2 + $0x130] sm:$0xff]
          %v1625 = vld [vmem:[#allocation2 + $0x138] sm:$0xff]
          %v1626 = vld [vmem:[#allocation2 + $0x140] sm:$0xff]
          %v1627 = vld [vmem:[#allocation2 + $0x148] sm:$0xff]
          %v1628 = vld [vmem:[#allocation2 + $0x150] sm:$0xff]
          %v1629 = vld [vmem:[#allocation2 + $0x158] sm:$0xff]
          %v1630 = vld [vmem:[#allocation2 + $0x160] sm:$0xff]
          %v1631 = vld [vmem:[#allocation2 + $0x168] sm:$0xff]
          %v1632 = vld [vmem:[#allocation2 + $0x170] sm:$0xff]
          %v1633 = vld [vmem:[#allocation2 + $0x178] sm:$0xff]
          %v1634 = vld [vmem:[#allocation2 + $0x180] sm:$0xff]
          %v1635 = vld [vmem:[#allocation2 + $0x188] sm:$0xff]
          %v1636 = vld [vmem:[#allocation2 + $0x190] sm:$0xff]
          %v1637 = vld [vmem:[#allocation2 + $0x198] sm:$0xff]
          %v1638 = vld [vmem:[#allocation2 + $0x1a0] sm:$0xff]
          %v1639 = vld [vmem:[#allocation2 + $0x1a8] sm:$0xff]
          %v1640 = vld [vmem:[#allocation2 + $0x1b0] sm:$0xff]
          %v1641 = vld [vmem:[#allocation2 + $0x1b8] sm:$0xff]
          %v1642 = vld [vmem:[#allocation2 + $0x1c0] sm:$0xff]
          %v1643 = vld [vmem:[#allocation2 + $0x1c8] sm:$0xff]
          %v1644 = vld [vmem:[#allocation2 + $0x1d0] sm:$0xff]
          %v1645 = vld [vmem:[#allocation2 + $0x1d8] sm:$0xff]
          %v1646 = vld [vmem:[#allocation2 + $0x1e0] sm:$0xff]
          %v1647 = vld [vmem:[#allocation2 + $0x1e8] sm:$0xff]
          %v1648 = vld [vmem:[#allocation2 + $0x1f0] sm:$0xff]
          %v1649 = vld [vmem:[#allocation2 + $0x1f8] sm:$0xff]
          %v1650 = vmax.f32 %v1586, %v1587
          %v1651 = vmax.f32 %v1650, %v1588
          %v1652 = vmax.f32 %v1651, %v1589
          %1653 = vmax.xlane.f32.xlu0 %v1652
          %v1654 = vpop.xlane.xlu0 %1653
          %v1655 = vmax.f32 %v1590, %v1591
          %v1656 = vmax.f32 %v1655, %v1592
          %v1657 = vmax.f32 %v1656, %v1593
          %1658 = vmax.xlane.f32.xlu0 %v1657
          %v1659 = vpop.xlane.xlu0 %1658
          %v1660 = vmax.f32 %v1594, %v1595
          %v1661 = vmax.f32 %v1660, %v1596
          %v1662 = vmax.f32 %v1661, %v1597
          %1663 = vmax.xlane.f32.xlu0 %v1662
          %v1664 = vpop.xlane.xlu0 %1663
          %v1665 = vmax.f32 %v1598, %v1599
          %v1666 = vmax.f32 %v1665, %v1600
          %v1667 = vmax.f32 %v1666, %v1601
          %1668 = vmax.xlane.f32.xlu0 %v1667
          %v1669 = vpop.xlane.xlu0 %1668
          %v1670 = vmax.f32 %v1602, %v1603
          %v1671 = vmax.f32 %v1670, %v1604
          %v1672 = vmax.f32 %v1671, %v1605
          %1673 = vmax.xlane.f32.xlu0 %v1672
          %v1674 = vpop.xlane.xlu0 %1673
          %v1675 = vmax.f32 %v1606, %v1607
          %v1676 = vmax.f32 %v1675, %v1608
          %v1677 = vmax.f32 %v1676, %v1609
          %1678 = vmax.xlane.f32.xlu0 %v1677
          %v1679 = vpop.xlane.xlu0 %1678
          %v1680 = vmax.f32 %v1610, %v1611
          %v1681 = vmax.f32 %v1680, %v1612
          %v1682 = vmax.f32 %v1681, %v1613
          %1683 = vmax.xlane.f32.xlu0 %v1682
          %v1684 = vpop.xlane.xlu0 %1683
          %v1685 = vmax.f32 %v1614, %v1615
          %v1686 = vmax.f32 %v1685, %v1616
          %v1687 = vmax.f32 %v1686, %v1617
          %1688 = vmax.xlane.f32.xlu0 %v1687
          %v1689 = vpop.xlane.xlu0 %1688
          %v1690 = vmax.f32 %v1618, %v1619
          %v1691 = vmax.f32 %v1690, %v1620
          %v1692 = vmax.f32 %v1691, %v1621
          %1693 = vmax.xlane.f32.xlu0 %v1692
          %v1694 = vpop.xlane.xlu0 %1693
          %v1695 = vmax.f32 %v1622, %v1623
          %v1696 = vmax.f32 %v1695, %v1624
          %v1697 = vmax.f32 %v1696, %v1625
          %1698 = vmax.xlane.f32.xlu0 %v1697
          %v1699 = vpop.xlane.xlu0 %1698
          %v1700 = vmax.f32 %v1626, %v1627
          %v1701 = vmax.f32 %v1700, %v1628
          %v1702 = vmax.f32 %v1701, %v1629
          %1703 = vmax.xlane.f32.xlu0 %v1702
          %v1704 = vpop.xlane.xlu0 %1703
          %v1705 = vmax.f32 %v1630, %v1631
          %v1706 = vmax.f32 %v1705, %v1632
          %v1707 = vmax.f32 %v1706, %v1633
          %1708 = vmax.xlane.f32.xlu0 %v1707
          %v1709 = vpop.xlane.xlu0 %1708
          %v1710 = vmax.f32 %v1634, %v1635
          %v1711 = vmax.f32 %v1710, %v1636
          %v1712 = vmax.f32 %v1711, %v1637
          %1713 = vmax.xlane.f32.xlu0 %v1712
          %v1714 = vpop.xlane.xlu0 %1713
          %v1715 = vmax.f32 %v1638, %v1639
          %v1716 = vmax.f32 %v1715, %v1640
          %v1717 = vmax.f32 %v1716, %v1641
          %1718 = vmax.xlane.f32.xlu0 %v1717
          %v1719 = vpop.xlane.xlu0 %1718
          %v1720 = vmax.f32 %v1642, %v1643
          %v1721 = vmax.f32 %v1720, %v1644
          %v1722 = vmax.f32 %v1721, %v1645
          %1723 = vmax.xlane.f32.xlu0 %v1722
          %v1724 = vpop.xlane.xlu0 %1723
          %v1725 = vmax.f32 %v1646, %v1647
          %v1726 = vmax.f32 %v1725, %v1648
          %v1727 = vmax.f32 %v1726, %v1649
          %1728 = vmax.xlane.f32.xlu0 %v1727
          %v1729 = vpop.xlane.xlu0 %1728
          %v1730 = vld [vmem:[%s7] sm:$0xff]
          %v1731 = vld [vmem:[%s7 + $0x8] sm:$0xff]
          %v1732 = vld [vmem:[%s7 + $0x10] sm:$0xff]
          %v1733 = vld [vmem:[%s7 + $0x18] sm:$0xff]
          %v1734 = vld [vmem:[%s7 + $0x20] sm:$0xff]
          %v1735 = vld [vmem:[%s7 + $0x28] sm:$0xff]
          %v1736 = vld [vmem:[%s7 + $0x30] sm:$0xff]
          %v1737 = vld [vmem:[%s7 + $0x38] sm:$0xff]
          %v1738 = vld [vmem:[%s7 + $0x40] sm:$0xff]
          %v1739 = vld [vmem:[%s7 + $0x48] sm:$0xff]
          %v1740 = vld [vmem:[%s7 + $0x50] sm:$0xff]
          %v1741 = vld [vmem:[%s7 + $0x58] sm:$0xff]
          %v1742 = vld [vmem:[%s7 + $0x60] sm:$0xff]
          %v1743 = vld [vmem:[%s7 + $0x68] sm:$0xff]
          %v1744 = vld [vmem:[%s7 + $0x70] sm:$0xff]
          %v1745 = vld [vmem:[%s7 + $0x78] sm:$0xff]
          %v1746 = vmul.f32 %v1654, %v1730
          %v1747 = vmul.f32 %v1659, %v1731
          %v1748 = vmul.f32 %v1664, %v1732
          %v1749 = vmul.f32 %v1669, %v1733
          %v1750 = vmul.f32 %v1674, %v1734
          %v1751 = vmul.f32 %v1679, %v1735
          %v1752 = vmul.f32 %v1684, %v1736
          %v1753 = vmul.f32 %v1689, %v1737
          %v1754 = vmul.f32 %v1694, %v1738
          %v1755 = vmul.f32 %v1699, %v1739
          %v1756 = vmul.f32 %v1704, %v1740
          %v1757 = vmul.f32 %v1709, %v1741
          %v1758 = vmul.f32 %v1714, %v1742
          %v1759 = vmul.f32 %v1719, %v1743
          %v1760 = vmul.f32 %v1724, %v1744
          %v1761 = vmul.f32 %v1729, %v1745
          %vm1762 = vcmask 7168
          %v1763 = vsel %vm1762, %v1746, 0.0
          %v1764 = vsel %vm1762, %v1747, 0.0
          %v1765 = vadd.f32 %v1763, %v1764
          %v1766 = vsel %vm1762, %v1748, 0.0
          %v1767 = vadd.f32 %v1765, %v1766
          %v1768 = vsel %vm1762, %v1749, 0.0
          %v1769 = vadd.f32 %v1767, %v1768
          %v1770 = vsel %vm1762, %v1750, 0.0
          %v1771 = vadd.f32 %v1769, %v1770
          %v1772 = vsel %vm1762, %v1751, 0.0
          %v1773 = vadd.f32 %v1771, %v1772
          %v1774 = vsel %vm1762, %v1752, 0.0
          %v1775 = vadd.f32 %v1773, %v1774
          %v1776 = vsel %vm1762, %v1753, 0.0
          %v1777 = vadd.f32 %v1775, %v1776
          %v1778 = vsel %vm1762, %v1754, 0.0
          %v1779 = vadd.f32 %v1777, %v1778
          %v1780 = vsel %vm1762, %v1755, 0.0
          %v1781 = vadd.f32 %v1779, %v1780
          %v1782 = vsel %vm1762, %v1756, 0.0
          %v1783 = vadd.f32 %v1781, %v1782
          %v1784 = vsel %vm1762, %v1757, 0.0
          %v1785 = vadd.f32 %v1783, %v1784
          %v1786 = vsel %vm1762, %v1758, 0.0
          %v1787 = vadd.f32 %v1785, %v1786
          %v1788 = vsel %vm1762, %v1759, 0.0
          %v1789 = vadd.f32 %v1787, %v1788
          %v1790 = vsel %vm1762, %v1760, 0.0
          %v1791 = vadd.f32 %v1789, %v1790
          %v1792 = vsel %vm1762, %v1761, 0.0
          %v1793 = vadd.f32 %v1791, %v1792
          %v1794 = vrot.slane %v1793, 4
          %v1795 = vadd.f32 %v1793, %v1794
          %v1796 = vrot.slane %v1795, 2
          %v1797 = vadd.f32 %v1795, %v1796
          %v1798 = vrot.slane %v1797, 1
          %v1799 = vadd.f32 %v1797, %v1798
          %s1800 = sld [smem:[#allocation3]]
          %v1801 = vstv %s1800
          %v1802 = vadd.f32 %v1799, %v1801
          %v1803 = vxor.u32 %v1802, 2147483648
          %v1804 = vmul.f32 %v1803, 1.442695
          %v1805 = vpow.pop %v1804
          %v1806 = vadd.f32 %v1805, 1.0
          %v1807 = vrcp.pop %v1806
          %v1808 = vmul.f32 1.0, %v1807
          %vm1809 = vcmask 1040384
          %v1810 = vsel %vm1809, %v1802, %v1808
          %1812 = vset.pattern.permute.xlu0 0
          %1813 = vperm.xlu0 %1812, %v1810
          %v1814 = vpop.permute.xlu0 %1813
          %1816 = vst [vmem:[%s349] sm:$0x3] %v1814
        $region68: #{tpu_custom_call.1} parent=55 // pred_fallthru
          _
        %s1817 = sand.u32 %s240, 1
        %s1818 = scalar_lea.sflag [#allocation5], %s1817
        %s1819 = sand.u32 %s240, 1
        %s1820 = smul.addr %s1819, 2
        %s1821 = scalar_lea.vmem [#allocation4], %s1820
        // Predicated region
        $region69: #{tpu_custom_call.1} parent=55 // pred_check
          %p1822 = pneg %p250
        $region70: #{tpu_custom_call.1} parent=55 // pred_check_branch
          %1824 = sbr.rel (%p1822) target = $region72
        $region71: #{tpu_custom_call.1} parent=55 // pred_region
          %s1826 = ssub.s32 32, 32
          %1827 = vsyncadd %s1818, %s1826
          %s1828 = smul.addr %s28, 32
          %s1829 = scalar_lea.hbm %s9, %s1828
          %s1831 = sshll.u32 %s1821, 4
          %s1832 = int_to_ptr.vmem [resolvable:$true] %s1831
          %1834 = dma.vmem_to_hbm [thread:$0]  %s1832, 32, %s1829, %s1818
        $region72: #{tpu_custom_call.1} parent=55 // pred_fallthru
          _
      $region56: #{tpu_custom_call.1} parent=5 // pred_fallthru
        _
      %p1835 = scmp.le.s32.totalorder 2, %s19
      // Predicated region
      $region73: #{tpu_custom_call.1} parent=5 // pred_check
        %p1836 = pneg %p1835
      $region74: #{tpu_custom_call.1} parent=5 // pred_check_branch
        %1838 = sbr.rel (%p1836) target = $region76
      $region75: #{tpu_custom_call.1} parent=5 // pred_region
        %s1839 = ssub.s32 %s19, 2
        // Predicated region
        $region77: #{tpu_custom_call.1} parent=75 // pred_check
          %p1840 = pneg %p256
        $region78: #{tpu_custom_call.1} parent=75 // pred_check_branch
          %1842 = sbr.rel (%p1840) target = $region80
        $region79: #{tpu_custom_call.1} parent=75 // pred_region
          %s1843 = sand.u32 %s241, 1
          %s1844 = scalar_lea.sflag [#allocation5], %s1843
          %s1845 = sand.u32 %s241, 1
          %s1846 = smul.addr %s1845, 2
          %s1847 = scalar_lea.vmem [#allocation4], %s1846
          %1848 = dma.done %s1844, 32
        $region80: #{tpu_custom_call.1} parent=75 // pred_fallthru
          _
      $region76: #{tpu_custom_call.1} parent=5 // pred_fallthru
        _
    $region6: #{tpu_custom_call.1} parent=1 // loop_footer
      %s23 = sadd.s32 1, %s19
    $region7: #{tpu_custom_call.1} parent=1 // loop_footer_branch
      %18 = sbr.rel target = $region3
    $region8: #{tpu_custom_call.1} parent=1 // loop_exit
      _
    %1849 = vsyncpa [#allocation5], 1
    %s1850 = scalar_lea.sflag [#allocation5], 1
    %1851 = vsyncpa %s1850, 1

</llo_original>
